<compile_context>
chip_gen: v7x
topology: tpu7x:2x2x1
jax: 0.10.0
libtpu: 0.0.40
codegen_flags: <defaults>
</compile_context>

<pallas_src>
import functools
import numpy as np
import jax
import jax.numpy as jnp
from jax.experimental import pallas as pl
from jax.experimental.pallas import tpu as pltpu

HIDDEN = 256
BN_EPS = 1e-5


def _round_up(x, m):
    return ((x + m - 1) // m) * m


def init_params(key, latent_dim, out_dim):
    """Deterministic synthetic parameters (PyTorch-Linear-like uniform init), f32."""
    ks = jax.random.split(key, 3)

    def lin(k, fan_in, fan_out):
        bound = 1.0 / np.sqrt(fan_in)
        kw, kb = jax.random.split(k)
        w = jax.random.uniform(kw, (fan_in, fan_out), jnp.float32, -bound, bound)
        b = jax.random.uniform(kb, (1, fan_out), jnp.float32, -bound, bound)
        return w, b

    w1, b1 = lin(ks[0], latent_dim, HIDDEN)
    w2, b2 = lin(ks[1], HIDDEN, HIDDEN)
    w3, b3 = lin(ks[2], HIDDEN, out_dim)
    # BatchNorm affine params: gamma=1, beta=0 (PyTorch default init)
    g1 = jnp.ones((1, HIDDEN), jnp.float32)
    be1 = jnp.zeros((1, HIDDEN), jnp.float32)
    g2 = jnp.ones((1, HIDDEN), jnp.float32)
    be2 = jnp.zeros((1, HIDDEN), jnp.float32)
    return (w1, b1, g1, be1, w2, b2, g2, be2, w3, b3)


def prepare_params(params, input_shape):
    """One-time (init-time) parameter prep, hoisted out of the per-call path:
       * bf16 weights (halve weight DMA bytes / resident VMEM),
       * lane-pad the final projection to a multiple of 128,
       * pack gamma/beta into a single sublane-aligned (8, HIDDEN) block,
       * drop b1/b2 (a Linear bias directly before training-mode BatchNorm is
         exactly cancelled by the mean subtraction)."""
    (w1, b1, g1, be1, w2, b2, g2, be2, w3, b3) = params
    del b1, b2
    out_dim = int(np.prod(input_shape))
    out_p = _round_up(out_dim, 128)
    if out_p != out_dim:
        w3 = jnp.pad(w3, ((0, 0), (0, out_p - out_dim)))
        b3 = jnp.pad(b3, ((0, 0), (0, out_p - out_dim)))
    vecs = jnp.concatenate(
        [g1, be1, g2, be2, jnp.zeros((4, HIDDEN), jnp.float32)], axis=0)
    return {
        "w1": w1.astype(jnp.bfloat16),
        "w2": w2.astype(jnp.bfloat16),
        "w3": w3.astype(jnp.bfloat16),
        "vecs": vecs,   # rows: g1, beta1, g2, beta2, (4 pad rows)
        "b3": b3,       # (1, out_p) f32
    }


def generator_forward(noise, prep, input_shape, *, block_rows=None,
                      out_dtype=jnp.float32):
    """Generator forward with exact full-batch BatchNorm statistics.

    Single pallas_call, grid = (3 phases, batch tiles). BN accumulators and the
    finalized (scale, shift) pairs live in VMEM scratch across the whole grid;
    weights are resident (constant index_maps); only noise/output tiles stream.
    """
    w1b, w2b, w3b = prep["w1"], prep["w2"], prep["w3"]
    vecs, b3p = prep["vecs"], prep["b3"]

    B, latent = noise.shape
    out_dim = int(np.prod(input_shape))
    out_p = b3p.shape[1]

    # Batch tile: 256 rows fills the 256-wide v6e/v7x MXU; use 128 on v5e.
    tb = 256 if block_rows is None else block_rows
    tb = max(16, min(_round_up(tb, 16), _round_up(B, 16)))
    nt = (B + tb - 1) // tb
    b_pad = nt * tb
    need_mask = b_pad != B

    noise_b = noise.astype(jnp.bfloat16)
    if need_mask:
        noise_b = jnp.pad(noise_b, ((0, b_pad - B), (0, 0)))

    def kernel(noise_ref, w1_ref, w2_ref, w3_ref, vecs_ref, b3_ref, out_ref,
               acc1, acc2, bn1, bn2):
        p = pl.program_id(0)              # phase: 0 stats1, 1 stats2, 2 emit
        t = pl.program_id(1)              # batch tile
        last = pl.num_programs(1) - 1

        def masked(h):
            # Zero out padded rows of a partial last tile so BN stats are exact.
            if not need_mask:
                return h
            rows = jax.lax.broadcasted_iota(jnp.int32, (tb, 1), 0) + t * tb
            return jnp.where(rows < B, h, 0.0)

        def layer1():
            return jnp.dot(noise_ref[...], w1_ref[...],
                           preferred_element_type=jnp.float32)

        def layer2(h1n):
            return jnp.dot(h1n.astype(jnp.bfloat16), w2_ref[...],
                           preferred_element_type=jnp.float32)

        def norm_relu(h, bn_ref):
            # Fused training-mode BN + ReLU: y = relu(h * scale + shift)
            return jnp.maximum(h * bn_ref[0:1, :] + bn_ref[1:2, :], 0.0)

        def finalize(acc_ref, bn_ref, g, be):
            inv_n = 1.0 / B
            mean = acc_ref[0:1, :] * inv_n
            var = acc_ref[1:2, :] * inv_n - mean * mean   # biased, like PyTorch
            scale = g * jax.lax.rsqrt(var + BN_EPS)       # rsqrt -> EUP slot
            bn_ref[0:1, :] = scale
            bn_ref[1:2, :] = be - mean * scale

        # ---- phase 0: full-batch statistics of layer-1 pre-activations ----
        @pl.when(p == 0)
        def _():
            @pl.when(t == 0)
            def _():
                acc1[...] = jnp.zeros_like(acc1)
                acc2[...] = jnp.zeros_like(acc2)

            h1 = masked(layer1())
            acc1[0:1, :] += jnp.sum(h1, axis=0, keepdims=True)
            acc1[1:2, :] += jnp.sum(h1 * h1, axis=0, keepdims=True)

            @pl.when(t == last)
            def _():
                finalize(acc1, bn1, vecs_ref[0:1, :], vecs_ref[1:2, :])

        # ---- phase 1: full-batch statistics of layer-2 pre-activations ----
        @pl.when(p == 1)
        def _():
            h2 = masked(layer2(norm_relu(layer1(), bn1)))
            acc2[0:1, :] += jnp.sum(h2, axis=0, keepdims=True)
            acc2[1:2, :] += jnp.sum(h2 * h2, axis=0, keepdims=True)

            @pl.when(t == last)
            def _():
                finalize(acc2, bn2, vecs_ref[2:3, :], vecs_ref[3:4, :])

        # ---- phase 2: normalized forward + final projection (writes output) ----
        @pl.when(p == 2)
        def _():
            h2n = norm_relu(layer2(norm_relu(layer1(), bn1)), bn2)
            out = jnp.dot(h2n.astype(jnp.bfloat16), w3_ref[...],
                          preferred_element_type=jnp.float32) + b3_ref[...]
            out_ref[...] = out.astype(out_ref.dtype)

    const = lambda p, t: (0, 0)           # weights / small vectors: VMEM-resident
    batch_tile = lambda p, t: (t, 0)
    # The output is only written in phase 2; pin its block index to 0 during the
    # stats phases so all revisits are consecutive and no garbage is written back.
    out_tile = lambda p, t: (jnp.where(p == 2, t, 0), 0)

    flops = 2 * b_pad * (3 * latent * HIDDEN + 2 * HIDDEN * HIDDEN + HIDDEN * out_p)
    bytes_accessed = (3 * b_pad * latent * 2
                      + (w1b.size + w2b.size + w3b.size) * 2
                      + vecs.size * 4 + b3p.size * 4
                      + b_pad * out_p * np.dtype(out_dtype).itemsize)

    flat = pl.pallas_call(
        kernel,
        out_shape=jax.ShapeDtypeStruct((b_pad, out_p), out_dtype),
        grid_spec=pltpu.PrefetchScalarGridSpec(
            num_scalar_prefetch=0,
            grid=(3, nt),
            in_specs=[
                pl.BlockSpec((tb, latent), batch_tile),      # noise (bf16)
                pl.BlockSpec((latent, HIDDEN), const),       # w1 (bf16)
                pl.BlockSpec((HIDDEN, HIDDEN), const),       # w2 (bf16)
                pl.BlockSpec((HIDDEN, out_p), const),        # w3 (bf16)
                pl.BlockSpec((8, HIDDEN), const),            # packed g/beta (f32)
                pl.BlockSpec((1, out_p), const),             # b3 (f32)
            ],
            out_specs=pl.BlockSpec((tb, out_p), out_tile),
            scratch_shapes=[
                pltpu.VMEM((2, HIDDEN), jnp.float32),        # acc1: sum1, sumsq1
                pltpu.VMEM((2, HIDDEN), jnp.float32),        # acc2: sum2, sumsq2
                pltpu.VMEM((2, HIDDEN), jnp.float32),        # bn1: scale1, shift1
                pltpu.VMEM((2, HIDDEN), jnp.float32),        # bn2: scale2, shift2
            ],
        ),
        compiler_params=pltpu.CompilerParams(
            # Both axes carry state (phase ordering / BN accumulators): sequential.
            dimension_semantics=("arbitrary", "arbitrary")),
        cost_estimate=pl.CostEstimate(
            flops=flops, transcendentals=2 * HIDDEN,
            bytes_accessed=bytes_accessed),
    )(noise_b, w1b, w2b, w3b, vecs, b3p)

    return flat[:B, :out_dim].reshape(B, *input_shape)


def reference_forward(noise, params, input_shape):
    """Pure-f32 PyTorch-equivalent forward (training-mode BatchNorm, with biases)."""
    (w1, b1, g1, be1, w2, b2, g2, be2, w3, b3) = params

    def bn(h, g, be):
        m = jnp.mean(h, axis=0, keepdims=True)
        v = jnp.mean((h - m) ** 2, axis=0, keepdims=True)
        return (h - m) * (g * jax.lax.rsqrt(v + BN_EPS)) + be

    h = jnp.maximum(bn(noise @ w1 + b1, g1, be1), 0.0)
    h = jnp.maximum(bn(h @ w2 + b2, g2, be2), 0.0)
    out = h @ w3 + b3
    return out.reshape(noise.shape[0], *input_shape)


def reference_forward_mixed(noise, params, input_shape):
    """Mirrors the kernel's numerics: bf16 matmul inputs, f32 accumulation,
    E[x^2]-mean^2 variance, fused scale/shift BN, pre-BN biases dropped
    (they are cancelled exactly by the mean subtraction)."""
    (w1, _b1, g1, be1, w2, _b2, g2, be2, w3, b3) = params
    n = noise.shape[0]

    def bn_relu(h, g, be):
        m = jnp.sum(h, axis=0, keepdims=True) / n
        v = jnp.sum(h * h, axis=0, keepdims=True) / n - m * m
        scale = g * jax.lax.rsqrt(v + BN_EPS)
        shift = be - m * scale
        return jnp.maximum(h * scale + shift, 0.0)

    bf = lambda a: a.astype(jnp.bfloat16)
    h = jnp.dot(bf(noise), bf(w1), preferred_element_type=jnp.float32)
    h = bn_relu(h, g1, be1)
    h = jnp.dot(bf(h), bf(w2), preferred_element_type=jnp.float32)
    h = bn_relu(h, g2, be2)
    out = jnp.dot(bf(h), bf(w3), preferred_element_type=jnp.float32) + b3
    return out.reshape(n, *input_shape)


if __name__ == "__main__":
    key = jax.random.PRNGKey(0)
    k_noise, k_params = jax.random.split(key)

    batch = 8
    latent_dim = 32
    input_shape = (1, 16, 16)          # Generator output image shape (C, H, W)
    out_dim = int(np.prod(input_shape))

    noise = jax.random.normal(k_noise, (batch, latent_dim), jnp.float32)
    params = init_params(k_params, latent_dim, out_dim)
    prep = prepare_params(params, input_shape)   # hoisted out of the call path

    fwd = jax.jit(functools.partial(generator_forward, input_shape=input_shape))
    out = jax.block_until_ready(fwd(noise, prep))
    assert out.shape == (batch, *input_shape), out.shape

    # Tight check against a reference with identical mixed-precision numerics.
    ref_mixed = reference_forward_mixed(noise, params, input_shape)
    np.testing.assert_allclose(np.asarray(out), np.asarray(ref_mixed),
                               rtol=2e-4, atol=2e-4)

    # Sanity check against the pure-f32 PyTorch-equivalent forward
    # (bf16 activations are a deliberate precision tradeoff, fine for a GAN).
    ref_f32 = reference_forward(noise, params, input_shape)
    np.testing.assert_allclose(np.asarray(out), np.asarray(ref_f32),
                               rtol=5e-2, atol=5e-2)

    print("KERNEL_OK")
</pallas_src>

<mosaic_0001>
module attributes {stable_mosaic.version = 11 : i64} {
  func.func @kernel(%arg0: i32, %arg1: i32, %arg2: memref<16x32xbf16, #tpu.memory_space<vmem>>, %arg3: memref<32x256xbf16, #tpu.memory_space<vmem>>, %arg4: memref<256x256xbf16, #tpu.memory_space<vmem>>, %arg5: memref<256x256xbf16, #tpu.memory_space<vmem>>, %arg6: memref<8x256xf32, #tpu.memory_space<vmem>>, %arg7: memref<1x256xf32, #tpu.memory_space<vmem>>, %arg8: memref<16x256xf32, #tpu.memory_space<vmem>>, %arg9: memref<2x256xf32, #tpu.memory_space<vmem>>, %arg10: memref<2x256xf32, #tpu.memory_space<vmem>>, %arg11: memref<2x256xf32, #tpu.memory_space<vmem>>, %arg12: memref<2x256xf32, #tpu.memory_space<vmem>>) attributes {dimension_semantics = [#tpu.dimension_semantics<arbitrary>, #tpu.dimension_semantics<arbitrary>], iteration_bounds = array<i64: 3, 1>, scalar_prefetch = 0 : i64, scratch_operands = 4 : i64, tpu.core_type = #tpu.core_type<tc>, window_params = [{transform_indices = @transform_0, window_bounds = array<i64: 16, 32>}, {pipeline_mode = #tpu.pipeline_mode<synchronous>, transform_indices = @transform_1, window_bounds = array<i64: 32, 256>}, {pipeline_mode = #tpu.pipeline_mode<synchronous>, transform_indices = @transform_2, window_bounds = array<i64: 256, 256>}, {pipeline_mode = #tpu.pipeline_mode<synchronous>, transform_indices = @transform_3, window_bounds = array<i64: 256, 256>}, {pipeline_mode = #tpu.pipeline_mode<synchronous>, transform_indices = @transform_4, window_bounds = array<i64: 8, 256>}, {pipeline_mode = #tpu.pipeline_mode<synchronous>, transform_indices = @transform_5, window_bounds = array<i64: 1, 256>}, {transform_indices = @transform_6, window_bounds = array<i64: 16, 256>}]} {
    %c0_i32 = arith.constant 0 : i32
    %0 = arith.cmpi eq, %arg0, %c0_i32 : i32
    %1 = arith.extui %0 : i1 to i32
    %c0_i32_0 = arith.constant 0 : i32
    %2 = arith.cmpi ne, %1, %c0_i32_0 : i32
    scf.if %2 {
      %c0_i32_3 = arith.constant 0 : i32
      %9 = arith.cmpi eq, %arg1, %c0_i32_3 : i32
      %10 = arith.extui %9 : i1 to i32
      %c0_i32_4 = arith.constant 0 : i32
      %11 = arith.cmpi ne, %10, %c0_i32_4 : i32
      scf.if %11 {
        %cst_20 = arith.constant 0.000000e+00 : f32
        %39 = vector.broadcast %cst_20 : f32 to vector<2x256xf32>
        %c0_21 = arith.constant 0 : index
        %c0_22 = arith.constant 0 : index
        %40 = vector.load %arg9[%c0_21, %c0_22] : memref<2x256xf32, #tpu.memory_space<vmem>>, vector<2x256xf32>
        tpu.vector_store %arg9[%c0_21, %c0_22], %39 {strides = array<i32>} : memref<2x256xf32, #tpu.memory_space<vmem>>, vector<2x256xf32>,
        %cst_23 = arith.constant 0.000000e+00 : f32
        %41 = vector.broadcast %cst_23 : f32 to vector<2x256xf32>
        %c0_24 = arith.constant 0 : index
        %c0_25 = arith.constant 0 : index
        %42 = vector.load %arg10[%c0_24, %c0_25] : memref<2x256xf32, #tpu.memory_space<vmem>>, vector<2x256xf32>
        tpu.vector_store %arg10[%c0_24, %c0_25], %41 {strides = array<i32>} : memref<2x256xf32, #tpu.memory_space<vmem>>, vector<2x256xf32>,
      } else {
      }
      %c0 = arith.constant 0 : index
      %c0_5 = arith.constant 0 : index
      %12 = vector.load %arg2[%c0, %c0_5] : memref<16x32xbf16, #tpu.memory_space<vmem>>, vector<16x32xbf16>
      %c0_6 = arith.constant 0 : index
      %c0_7 = arith.constant 0 : index
      %13 = vector.load %arg3[%c0_6, %c0_7] : memref<32x256xbf16, #tpu.memory_space<vmem>>, vector<32x256xbf16>
      %cst = arith.constant dense<0.000000e+00> : vector<16x256xf32>
      %14 = tpu.matmul %12, %13, %cst {dimension_numbers = #tpu.dot_dimension_numbers<[1], [0], [0], [1], [0, 0, 1, 1], [], []>} : vector<16x32xbf16>, vector<32x256xbf16>, vector<16x256xf32> -> vector<16x256xf32>
      %15 = tpu.iota {dimensions = array<i32: 0>} : vector<16x1xi32>
      %c16_i32 = arith.constant 16 : i32
      %16 = arith.muli %arg1, %c16_i32 : i32
      %17 = vector.broadcast %16 : i32 to vector<16x1xi32>
      %18 = arith.addi %15, %17 : vector<16x1xi32>
      %c8_i32 = arith.constant 8 : i32
      %19 = vector.broadcast %c8_i32 : i32 to vector<16x1xi32>
      %20 = arith.cmpi slt, %18, %19 : vector<16x1xi32>
      %cst_8 = arith.constant 0.000000e+00 : f32
      %21 = vector.shape_cast %20 : vector<16x1xi1> to vector<16x1xi1>
      %22 = vector.broadcast %21 : vector<16x1xi1> to vector<16x256xi1>
      %23 = vector.broadcast %cst_8 : f32 to vector<16x256xf32>
      %24 = arith.select %22, %14, %23 : vector<16x256xi1>, vector<16x256xf32>
      %c0_9 = arith.constant 0 : index
      %c0_10 = arith.constant 0 : index
      %25 = vector.load %arg9[%c0_9, %c0_10] : memref<2x256xf32, #tpu.memory_space<vmem>>, vector<1x256xf32>
      %cst_11 = arith.constant dense<0.000000e+00> : vector<256xf32>
      %26 = vector.multi_reduction <add>, %24, %cst_11 [0] : vector<16x256xf32> to vector<256xf32>
      %27 = vector.shape_cast %26 : vector<256xf32> to vector<1x256xf32>
      %28 = arith.addf %25, %27 : vector<1x256xf32>
      %c0_12 = arith.constant 0 : index
      %c0_13 = arith.constant 0 : index
      %29 = vector.load %arg9[%c0_12, %c0_13] : memref<2x256xf32, #tpu.memory_space<vmem>>, vector<1x256xf32>
      tpu.vector_store %arg9[%c0_12, %c0_13], %28 {strides = array<i32>} : memref<2x256xf32, #tpu.memory_space<vmem>>, vector<1x256xf32>,
      %c1 = arith.constant 1 : index
      %c0_14 = arith.constant 0 : index
      %30 = vector.load %arg9[%c1, %c0_14] : memref<2x256xf32, #tpu.memory_space<vmem>>, vector<1x256xf32>
      %31 = arith.mulf %24, %24 : vector<16x256xf32>
      %cst_15 = arith.constant dense<0.000000e+00> : vector<256xf32>
      %32 = vector.multi_reduction <add>, %31, %cst_15 [0] : vector<16x256xf32> to vector<256xf32>
      %33 = vector.shape_cast %32 : vector<256xf32> to vector<1x256xf32>
      %34 = arith.addf %30, %33 : vector<1x256xf32>
      %c1_16 = arith.constant 1 : index
      %c0_17 = arith.constant 0 : index
      %35 = vector.load %arg9[%c1_16, %c0_17] : memref<2x256xf32, #tpu.memory_space<vmem>>, vector<1x256xf32>
      tpu.vector_store %arg9[%c1_16, %c0_17], %34 {strides = array<i32>} : memref<2x256xf32, #tpu.memory_space<vmem>>, vector<1x256xf32>,
      %c0_i32_18 = arith.constant 0 : i32
      %36 = arith.cmpi eq, %arg1, %c0_i32_18 : i32
      %37 = arith.extui %36 : i1 to i32
      %c0_i32_19 = arith.constant 0 : i32
      %38 = arith.cmpi ne, %37, %c0_i32_19 : i32
      scf.if %38 {
        %c0_20 = arith.constant 0 : index
        %c0_21 = arith.constant 0 : index
        %39 = vector.load %arg6[%c0_20, %c0_21] : memref<8x256xf32, #tpu.memory_space<vmem>>, vector<1x256xf32>
        %c1_22 = arith.constant 1 : index
        %c0_23 = arith.constant 0 : index
        %40 = vector.load %arg6[%c1_22, %c0_23] : memref<8x256xf32, #tpu.memory_space<vmem>>, vector<1x256xf32>
        %c0_24 = arith.constant 0 : index
        %c0_25 = arith.constant 0 : index
        %41 = vector.load %arg9[%c0_24, %c0_25] : memref<2x256xf32, #tpu.memory_space<vmem>>, vector<1x256xf32>
        %cst_26 = arith.constant 1.250000e-01 : f32
        %42 = vector.broadcast %cst_26 : f32 to vector<1x256xf32>
        %43 = arith.mulf %41, %42 : vector<1x256xf32>
        %c1_27 = arith.constant 1 : index
        %c0_28 = arith.constant 0 : index
        %44 = vector.load %arg9[%c1_27, %c0_28] : memref<2x256xf32, #tpu.memory_space<vmem>>, vector<1x256xf32>
        %cst_29 = arith.constant 1.250000e-01 : f32
        %45 = vector.broadcast %cst_29 : f32 to vector<1x256xf32>
        %46 = arith.mulf %44, %45 : vector<1x256xf32>
        %47 = arith.mulf %43, %43 : vector<1x256xf32>
        %48 = arith.subf %46, %47 : vector<1x256xf32>
        %cst_30 = arith.constant 9.99999974E-6 : f32
        %49 = vector.broadcast %cst_30 : f32 to vector<1x256xf32>
        %50 = arith.addf %48, %49 : vector<1x256xf32>
        %51 = math.rsqrt %50 : vector<1x256xf32>
        %52 = arith.mulf %39, %51 : vector<1x256xf32>
        %c0_31 = arith.constant 0 : index
        %c0_32 = arith.constant 0 : index
        %53 = vector.load %arg11[%c0_31, %c0_32] : memref<2x256xf32, #tpu.memory_space<vmem>>, vector<1x256xf32>
        tpu.vector_store %arg11[%c0_31, %c0_32], %52 {strides = array<i32>} : memref<2x256xf32, #tpu.memory_space<vmem>>, vector<1x256xf32>,
        %54 = arith.mulf %43, %52 : vector<1x256xf32>
        %55 = arith.subf %40, %54 : vector<1x256xf32>
        %c1_33 = arith.constant 1 : index
        %c0_34 = arith.constant 0 : index
        %56 = vector.load %arg11[%c1_33, %c0_34] : memref<2x256xf32, #tpu.memory_space<vmem>>, vector<1x256xf32>
        tpu.vector_store %arg11[%c1_33, %c0_34], %55 {strides = array<i32>} : memref<2x256xf32, #tpu.memory_space<vmem>>, vector<1x256xf32>,
      } else {
      }
    } else {
    }
    %c1_i32 = arith.constant 1 : i32
    %3 = arith.cmpi eq, %arg0, %c1_i32 : i32
    %4 = arith.extui %3 : i1 to i32
    %c0_i32_1 = arith.constant 0 : i32
    %5 = arith.cmpi ne, %4, %c0_i32_1 : i32
    scf.if %5 {
      %c0 = arith.constant 0 : index
      %c0_3 = arith.constant 0 : index
      %9 = vector.load %arg2[%c0, %c0_3] : memref<16x32xbf16, #tpu.memory_space<vmem>>, vector<16x32xbf16>
      %c0_4 = arith.constant 0 : index
      %c0_5 = arith.constant 0 : index
      %10 = vector.load %arg3[%c0_4, %c0_5] : memref<32x256xbf16, #tpu.memory_space<vmem>>, vector<32x256xbf16>
      %cst = arith.constant dense<0.000000e+00> : vector<16x256xf32>
      %11 = tpu.matmul %9, %10, %cst {dimension_numbers = #tpu.dot_dimension_numbers<[1], [0], [0], [1], [0, 0, 1, 1], [], []>} : vector<16x32xbf16>, vector<32x256xbf16>, vector<16x256xf32> -> vector<16x256xf32>
      %c0_6 = arith.constant 0 : index
      %c0_7 = arith.constant 0 : index
      %12 = vector.load %arg11[%c0_6, %c0_7] : memref<2x256xf32, #tpu.memory_space<vmem>>, vector<1x256xf32>
      %13 = vector.broadcast %12 : vector<1x256xf32> to vector<16x256xf32>
      %14 = arith.mulf %11, %13 : vector<16x256xf32>
      %c1 = arith.constant 1 : index
      %c0_8 = arith.constant 0 : index
      %15 = vector.load %arg11[%c1, %c0_8] : memref<2x256xf32, #tpu.memory_space<vmem>>, vector<1x256xf32>
      %16 = vector.broadcast %15 : vector<1x256xf32> to vector<16x256xf32>
      %17 = arith.addf %14, %16 : vector<16x256xf32>
      %cst_9 = arith.constant 0.000000e+00 : f32
      %18 = vector.broadcast %cst_9 : f32 to vector<16x256xf32>
      %19 = arith.maximumf %17, %18 : vector<16x256xf32>
      %20 = arith.truncf %19 : vector<16x256xf32> to vector<16x256xbf16>
      %c0_10 = arith.constant 0 : index
      %c0_11 = arith.constant 0 : index
      %21 = vector.load %arg4[%c0_10, %c0_11] : memref<256x256xbf16, #tpu.memory_space<vmem>>, vector<256x256xbf16>
      %cst_12 = arith.constant dense<0.000000e+00> : vector<16x256xf32>
      %22 = tpu.matmul %20, %21, %cst_12 {dimension_numbers = #tpu.dot_dimension_numbers<[1], [0], [0], [1], [0, 0, 1, 1], [], []>} : vector<16x256xbf16>, vector<256x256xbf16>, vector<16x256xf32> -> vector<16x256xf32>
      %23 = tpu.iota {dimensions = array<i32: 0>} : vector<16x1xi32>
      %c16_i32 = arith.constant 16 : i32
      %24 = arith.muli %arg1, %c16_i32 : i32
      %25 = vector.broadcast %24 : i32 to vector<16x1xi32>
      %26 = arith.addi %23, %25 : vector<16x1xi32>
      %c8_i32 = arith.constant 8 : i32
      %27 = vector.broadcast %c8_i32 : i32 to vector<16x1xi32>
      %28 = arith.cmpi slt, %26, %27 : vector<16x1xi32>
      %cst_13 = arith.constant 0.000000e+00 : f32
      %29 = vector.shape_cast %28 : vector<16x1xi1> to vector<16x1xi1>
      %30 = vector.broadcast %29 : vector<16x1xi1> to vector<16x256xi1>
      %31 = vector.broadcast %cst_13 : f32 to vector<16x256xf32>
      %32 = arith.select %30, %22, %31 : vector<16x256xi1>, vector<16x256xf32>
      %c0_14 = arith.constant 0 : index
      %c0_15 = arith.constant 0 : index
      %33 = vector.load %arg10[%c0_14, %c0_15] : memref<2x256xf32, #tpu.memory_space<vmem>>, vector<1x256xf32>
      %cst_16 = arith.constant dense<0.000000e+00> : vector<256xf32>
      %34 = vector.multi_reduction <add>, %32, %cst_16 [0] : vector<16x256xf32> to vector<256xf32>
      %35 = vector.shape_cast %34 : vector<256xf32> to vector<1x256xf32>
      %36 = arith.addf %33, %35 : vector<1x256xf32>
      %c0_17 = arith.constant 0 : index
      %c0_18 = arith.constant 0 : index
      %37 = vector.load %arg10[%c0_17, %c0_18] : memref<2x256xf32, #tpu.memory_space<vmem>>, vector<1x256xf32>
      tpu.vector_store %arg10[%c0_17, %c0_18], %36 {strides = array<i32>} : memref<2x256xf32, #tpu.memory_space<vmem>>, vector<1x256xf32>,
      %c1_19 = arith.constant 1 : index
      %c0_20 = arith.constant 0 : index
      %38 = vector.load %arg10[%c1_19, %c0_20] : memref<2x256xf32, #tpu.memory_space<vmem>>, vector<1x256xf32>
      %39 = arith.mulf %32, %32 : vector<16x256xf32>
      %cst_21 = arith.constant dense<0.000000e+00> : vector<256xf32>
      %40 = vector.multi_reduction <add>, %39, %cst_21 [0] : vector<16x256xf32> to vector<256xf32>
      %41 = vector.shape_cast %40 : vector<256xf32> to vector<1x256xf32>
      %42 = arith.addf %38, %41 : vector<1x256xf32>
      %c1_22 = arith.constant 1 : index
      %c0_23 = arith.constant 0 : index
      %43 = vector.load %arg10[%c1_22, %c0_23] : memref<2x256xf32, #tpu.memory_space<vmem>>, vector<1x256xf32>
      tpu.vector_store %arg10[%c1_22, %c0_23], %42 {strides = array<i32>} : memref<2x256xf32, #tpu.memory_space<vmem>>, vector<1x256xf32>,
      %c0_i32_24 = arith.constant 0 : i32
      %44 = arith.cmpi eq, %arg1, %c0_i32_24 : i32
      %45 = arith.extui %44 : i1 to i32
      %c0_i32_25 = arith.constant 0 : i32
      %46 = arith.cmpi ne, %45, %c0_i32_25 : i32
      scf.if %46 {
        %c2 = arith.constant 2 : index
        %c0_26 = arith.constant 0 : index
        %47 = vector.load %arg6[%c2, %c0_26] : memref<8x256xf32, #tpu.memory_space<vmem>>, vector<1x256xf32>
        %c3 = arith.constant 3 : index
        %c0_27 = arith.constant 0 : index
        %48 = vector.load %arg6[%c3, %c0_27] : memref<8x256xf32, #tpu.memory_space<vmem>>, vector<1x256xf32>
        %c0_28 = arith.constant 0 : index
        %c0_29 = arith.constant 0 : index
        %49 = vector.load %arg10[%c0_28, %c0_29] : memref<2x256xf32, #tpu.memory_space<vmem>>, vector<1x256xf32>
        %cst_30 = arith.constant 1.250000e-01 : f32
        %50 = vector.broadcast %cst_30 : f32 to vector<1x256xf32>
        %51 = arith.mulf %49, %50 : vector<1x256xf32>
        %c1_31 = arith.constant 1 : index
        %c0_32 = arith.constant 0 : index
        %52 = vector.load %arg10[%c1_31, %c0_32] : memref<2x256xf32, #tpu.memory_space<vmem>>, vector<1x256xf32>
        %cst_33 = arith.constant 1.250000e-01 : f32
        %53 = vector.broadcast %cst_33 : f32 to vector<1x256xf32>
        %54 = arith.mulf %52, %53 : vector<1x256xf32>
        %55 = arith.mulf %51, %51 : vector<1x256xf32>
        %56 = arith.subf %54, %55 : vector<1x256xf32>
        %cst_34 = arith.constant 9.99999974E-6 : f32
        %57 = vector.broadcast %cst_34 : f32 to vector<1x256xf32>
        %58 = arith.addf %56, %57 : vector<1x256xf32>
        %59 = math.rsqrt %58 : vector<1x256xf32>
        %60 = arith.mulf %47, %59 : vector<1x256xf32>
        %c0_35 = arith.constant 0 : index
        %c0_36 = arith.constant 0 : index
        %61 = vector.load %arg12[%c0_35, %c0_36] : memref<2x256xf32, #tpu.memory_space<vmem>>, vector<1x256xf32>
        tpu.vector_store %arg12[%c0_35, %c0_36], %60 {strides = array<i32>} : memref<2x256xf32, #tpu.memory_space<vmem>>, vector<1x256xf32>,
        %62 = arith.mulf %51, %60 : vector<1x256xf32>
        %63 = arith.subf %48, %62 : vector<1x256xf32>
        %c1_37 = arith.constant 1 : index
        %c0_38 = arith.constant 0 : index
        %64 = vector.load %arg12[%c1_37, %c0_38] : memref<2x256xf32, #tpu.memory_space<vmem>>, vector<1x256xf32>
        tpu.vector_store %arg12[%c1_37, %c0_38], %63 {strides = array<i32>} : memref<2x256xf32, #tpu.memory_space<vmem>>, vector<1x256xf32>,
      } else {
      }
    } else {
    }
    %c2_i32 = arith.constant 2 : i32
    %6 = arith.cmpi eq, %arg0, %c2_i32 : i32
    %7 = arith.extui %6 : i1 to i32
    %c0_i32_2 = arith.constant 0 : i32
    %8 = arith.cmpi ne, %7, %c0_i32_2 : i32
    scf.if %8 {
      %c0 = arith.constant 0 : index
      %c0_3 = arith.constant 0 : index
      %9 = vector.load %arg2[%c0, %c0_3] : memref<16x32xbf16, #tpu.memory_space<vmem>>, vector<16x32xbf16>
      %c0_4 = arith.constant 0 : index
      %c0_5 = arith.constant 0 : index
      %10 = vector.load %arg3[%c0_4, %c0_5] : memref<32x256xbf16, #tpu.memory_space<vmem>>, vector<32x256xbf16>
      %cst = arith.constant dense<0.000000e+00> : vector<16x256xf32>
      %11 = tpu.matmul %9, %10, %cst {dimension_numbers = #tpu.dot_dimension_numbers<[1], [0], [0], [1], [0, 0, 1, 1], [], []>} : vector<16x32xbf16>, vector<32x256xbf16>, vector<16x256xf32> -> vector<16x256xf32>
      %c0_6 = arith.constant 0 : index
      %c0_7 = arith.constant 0 : index
      %12 = vector.load %arg11[%c0_6, %c0_7] : memref<2x256xf32, #tpu.memory_space<vmem>>, vector<1x256xf32>
      %13 = vector.broadcast %12 : vector<1x256xf32> to vector<16x256xf32>
      %14 = arith.mulf %11, %13 : vector<16x256xf32>
      %c1 = arith.constant 1 : index
      %c0_8 = arith.constant 0 : index
      %15 = vector.load %arg11[%c1, %c0_8] : memref<2x256xf32, #tpu.memory_space<vmem>>, vector<1x256xf32>
      %16 = vector.broadcast %15 : vector<1x256xf32> to vector<16x256xf32>
      %17 = arith.addf %14, %16 : vector<16x256xf32>
      %cst_9 = arith.constant 0.000000e+00 : f32
      %18 = vector.broadcast %cst_9 : f32 to vector<16x256xf32>
      %19 = arith.maximumf %17, %18 : vector<16x256xf32>
      %20 = arith.truncf %19 : vector<16x256xf32> to vector<16x256xbf16>
      %c0_10 = arith.constant 0 : index
      %c0_11 = arith.constant 0 : index
      %21 = vector.load %arg4[%c0_10, %c0_11] : memref<256x256xbf16, #tpu.memory_space<vmem>>, vector<256x256xbf16>
      %cst_12 = arith.constant dense<0.000000e+00> : vector<16x256xf32>
      %22 = tpu.matmul %20, %21, %cst_12 {dimension_numbers = #tpu.dot_dimension_numbers<[1], [0], [0], [1], [0, 0, 1, 1], [], []>} : vector<16x256xbf16>, vector<256x256xbf16>, vector<16x256xf32> -> vector<16x256xf32>
      %c0_13 = arith.constant 0 : index
      %c0_14 = arith.constant 0 : index
      %23 = vector.load %arg12[%c0_13, %c0_14] : memref<2x256xf32, #tpu.memory_space<vmem>>, vector<1x256xf32>
      %24 = vector.broadcast %23 : vector<1x256xf32> to vector<16x256xf32>
      %25 = arith.mulf %22, %24 : vector<16x256xf32>
      %c1_15 = arith.constant 1 : index
      %c0_16 = arith.constant 0 : index
      %26 = vector.load %arg12[%c1_15, %c0_16] : memref<2x256xf32, #tpu.memory_space<vmem>>, vector<1x256xf32>
      %27 = vector.broadcast %26 : vector<1x256xf32> to vector<16x256xf32>
      %28 = arith.addf %25, %27 : vector<16x256xf32>
      %cst_17 = arith.constant 0.000000e+00 : f32
      %29 = vector.broadcast %cst_17 : f32 to vector<16x256xf32>
      %30 = arith.maximumf %28, %29 : vector<16x256xf32>
      %31 = arith.truncf %30 : vector<16x256xf32> to vector<16x256xbf16>
      %c0_18 = arith.constant 0 : index
      %c0_19 = arith.constant 0 : index
      %32 = vector.load %arg5[%c0_18, %c0_19] : memref<256x256xbf16, #tpu.memory_space<vmem>>, vector<256x256xbf16>
      %cst_20 = arith.constant dense<0.000000e+00> : vector<16x256xf32>
      %33 = tpu.matmul %31, %32, %cst_20 {dimension_numbers = #tpu.dot_dimension_numbers<[1], [0], [0], [1], [0, 0, 1, 1], [], []>} : vector<16x256xbf16>, vector<256x256xbf16>, vector<16x256xf32> -> vector<16x256xf32>
      %c0_21 = arith.constant 0 : index
      %c0_22 = arith.constant 0 : index
      %34 = vector.load %arg7[%c0_21, %c0_22] : memref<1x256xf32, #tpu.memory_space<vmem>>, vector<1x256xf32>
      %35 = vector.broadcast %34 : vector<1x256xf32> to vector<16x256xf32>
      %36 = arith.addf %33, %35 : vector<16x256xf32>
      %c0_23 = arith.constant 0 : index
      %c0_24 = arith.constant 0 : index
      %37 = vector.load %arg8[%c0_23, %c0_24] : memref<16x256xf32, #tpu.memory_space<vmem>>, vector<16x256xf32>
      tpu.vector_store %arg8[%c0_23, %c0_24], %36 {strides = array<i32>} : memref<16x256xf32, #tpu.memory_space<vmem>>, vector<16x256xf32>,
    } else {
    }
    return
  }
  func.func @transform_0(%arg0: i32, %arg1: i32) -> (i32, i32) {
    %c0_i32 = arith.constant 0 : i32
    %c0_i32_0 = arith.constant 0 : i32
    return %arg1, %c0_i32 : i32, i32
  }
  func.func @transform_1(%arg0: i32, %arg1: i32) -> (i32, i32) {
    %c0_i32 = arith.constant 0 : i32
    %c0_i32_0 = arith.constant 0 : i32
    %c0_i32_1 = arith.constant 0 : i32
    return %c0_i32, %c0_i32_0 : i32, i32
  }
  func.func @transform_2(%arg0: i32, %arg1: i32) -> (i32, i32) {
    %c0_i32 = arith.constant 0 : i32
    %c0_i32_0 = arith.constant 0 : i32
    %c0_i32_1 = arith.constant 0 : i32
    return %c0_i32, %c0_i32_0 : i32, i32
  }
  func.func @transform_3(%arg0: i32, %arg1: i32) -> (i32, i32) {
    %c0_i32 = arith.constant 0 : i32
    %c0_i32_0 = arith.constant 0 : i32
    %c0_i32_1 = arith.constant 0 : i32
    return %c0_i32, %c0_i32_0 : i32, i32
  }
  func.func @transform_4(%arg0: i32, %arg1: i32) -> (i32, i32) {
    %c0_i32 = arith.constant 0 : i32
    %c0_i32_0 = arith.constant 0 : i32
    %c0_i32_1 = arith.constant 0 : i32
    return %c0_i32, %c0_i32_0 : i32, i32
  }
  func.func @transform_5(%arg0: i32, %arg1: i32) -> (i32, i32) {
    %c0_i32 = arith.constant 0 : i32
    %c0_i32_0 = arith.constant 0 : i32
    %c0_i32_1 = arith.constant 0 : i32
    return %c0_i32, %c0_i32_0 : i32, i32
  }
  func.func @transform_6(%arg0: i32, %arg1: i32) -> (i32, i32) {
    %c2_i32 = arith.constant 2 : i32
    %0 = arith.cmpi eq, %arg0, %c2_i32 : i32
    %c0_i32 = arith.constant 0 : i32
    %1 = arith.select %0, %arg1, %c0_i32 : i32
    %c0_i32_0 = arith.constant 0 : i32
    %c0_i32_1 = arith.constant 0 : i32
    return %1, %c0_i32_0 : i32, i32
  }
}

</mosaic_0001>

<llo_original>
// kernel: generator_forward.1
$region0: #{generator_forward.1}
  #allocation0 [shape = 'u32[]', space=smem, size = 0x4, offset = 0x4, fixed_abs, tag = 'smem constant byte address 0x4 - core index']
  #allocation1 [shape = 'u32[144,128]{1,0:T(1,128)}', space=vmem, size = 0x12000, scoped, tag = 'internal scratch']
  #allocation2 [shape = 'f32[2,256]{1,0:T(2,128)}', space=vmem, size = 0x800, scoped, tag = 'scratch operand']
  #allocation3 [shape = 'f32[2,256]{1,0:T(2,128)}', space=vmem, size = 0x800, scoped, tag = 'scratch operand']
  #allocation4 [shape = 'f32[2,256]{1,0:T(2,128)}', space=vmem, size = 0x800, scoped, tag = 'scratch operand']
  #allocation5 [shape = 'f32[2,256]{1,0:T(2,128)}', space=vmem, size = 0x800, scoped, tag = 'scratch operand']
  %s0 = inlined_call_operand.vmem [shape: bf16[16,32], index: 0, kind: input, shape index: {}]
  %s1 = inlined_call_operand.vmem [shape: bf16[32,256], index: 1, kind: input, shape index: {}]
  %s2 = inlined_call_operand.hbm [shape: bf16[256,256], index: 2, kind: input, shape index: {}]
  %s3 = inlined_call_operand.hbm [shape: bf16[256,256], index: 3, kind: input, shape index: {}]
  %s4 = inlined_call_operand.hbm [shape: f32[8,256], index: 4, kind: input, shape index: {}]
  %s5 = inlined_call_operand.vmem [shape: f32[1,256], index: 5, kind: input, shape index: {}]
  %s6 = inlined_call_operand.vmem [shape: f32[16,256], index: 6, kind: output, shape index: {}]
  %s7 = sld [smem:[#allocation0]]
  $region93: #{generator_forward.1} parent=0
    _
  %s9 = ssub.s32 1, %s7
  %s10 = scalar_select 0, %s9, %s7
  $region1: #{generator_forward.1} parent=0
    #allocation6 [shape = 'u8[131072]{0}', space=vmem, size = 0x20000, scoped, tag = 'input window, operand 2, single buffered']
    #allocation7 [shape = 's32[2]{0}', space=sflag, size = 0x8, scoped, tag = 'scoped memory for generator_forward.1']
    #allocation8 [shape = 'u8[131072]{0}', space=vmem, size = 0x20000, scoped, tag = 'input window, operand 3, single buffered']
    #allocation9 [shape = 's32[1]{0}', space=sflag, size = 0x4, scoped, tag = 'scoped memory for generator_forward.1']
    #allocation10 [shape = 'u8[8192]{0}', space=vmem, size = 0x2000, scoped, tag = 'input window, operand 4, single buffered']
    %11 = vsyncpa [#allocation7], 0
    %12 = vsyncpa [#allocation9], 0
    loop: start=0, step=1, limit=5
    $region2: #{generator_forward.1} parent=1 // loop_pre_header
      _
    $region3: #{generator_forward.1} parent=1 // loop_header
      %s14 = sphi 0, %s18
      %p15 = scmp.ge.s32.totalorder %s14, 5
      %s21 = sphi 0, %s33
      %s22 = sphi 0, %s29
      %s23 = sphi 0, %s21
      %s24 = sphi 0, %s22
      %s25 = sphi 0, %s23
      %s26 = sphi 0, %s24
      %s36 = sphi 0, %s38
      %s39 = sphi 0, %s36
      %s40 = sphi 0, %s39
      %s56 = sphi 0, %s40
      %s60 = sphi 0, %s60
      %s62 = sphi 0, %s60
      %s63 = sphi 0, %s62
      %s77 = sphi 0, %s63
      %s81 = sphi 0, %s81
      %s83 = sphi 0, %s81
      %s84 = sphi 0, %s83
      %s98 = sphi 0, %s84
      %s102 = sphi 0, %s102
      %s104 = sphi 0, %s102
      %s105 = sphi 0, %s104
      %s119 = sphi 0, %s105
      %s123 = sphi 0, %s123
      %s125 = sphi 0, %s123
      %s126 = sphi 0, %s125
      %s140 = sphi 0, %s126
      %s144 = sphi 0, %s144
      %s146 = sphi 0, %s144
      %s147 = sphi 0, %s146
      %s161 = sphi 0, %s147
      %s171 = sphi 0, %s173
      %s174 = sphi 0, %s171
      %s175 = sphi 0, %s174
      %s191 = sphi 0, %s175
    $region4: #{generator_forward.1} parent=1 // loop_header_branch
      %17 = sbr.rel (%p15) target = $region8
    $region5: #{generator_forward.1} parent=1 // loop_body
      %s19 = ssub.s32 %s14, 1
      %s20 = ssub.s32 %s14, 2
      %s27 = sadd.s32 1, %s22
      %p28 = scmp.ge.s32.totalorder %s27, 1
      %s29 = scalar_select %p28, 0, %s27
      %s30 = sadd.s32 1, %s21
      %s31 = scalar_select %p28, %s30, %s21
      %p32 = scmp.ge.s32.totalorder %s31, 3
      %s33 = scalar_select %p32, 0, %s31
      %s34 = ssub.s32 %s22, %s29
      %p35 = scmp.eq.s32.totalorder %s34, 0
      %s37 = sadd.s32 %s36, 1
      %s38 = scalar_select %p35, %s36, %s37
      %p41 = pneg %p35
      %p42 = scmp.eq.s32.totalorder %s14, 2
      %p43 = por %p41, %p42
      %p44 = scmp.ne.s32.totalorder %s36, %s39
      %p45 = scmp.eq.s32.totalorder %s14, 0
      %p46 = por %p44, %p45
      %p47 = scmp.ne.s32.totalorder %s36, %s39
      %p48 = scmp.eq.s32.totalorder %s19, 2
      %p49 = por %p47, %p48
      %p50 = scmp.ne.s32.totalorder %s39, %s40
      %p51 = scmp.eq.s32.totalorder %s19, 0
      %p52 = por %p50, %p51
      %p53 = scmp.ne.s32.totalorder %s39, %s40
      %p54 = scmp.eq.s32.totalorder %s20, 2
      %p55 = por %p53, %p54
      %p57 = scmp.ne.s32.totalorder %s40, %s56
      %p58 = scmp.eq.s32.totalorder %s20, 0
      %p59 = por %p57, %p58
      %s61 = sadd.s32 %s60, 1
      %p64 = scmp.eq.s32.totalorder %s14, 2
      %p65 = scmp.ne.s32.totalorder %s60, %s62
      %p66 = scmp.eq.s32.totalorder %s14, 0
      %p67 = por %p65, %p66
      %p68 = scmp.ne.s32.totalorder %s60, %s62
      %p69 = scmp.eq.s32.totalorder %s19, 2
      %p70 = por %p68, %p69
      %p71 = scmp.ne.s32.totalorder %s62, %s63
      %p72 = scmp.eq.s32.totalorder %s19, 0
      %p73 = por %p71, %p72
      %p74 = scmp.ne.s32.totalorder %s62, %s63
      %p75 = scmp.eq.s32.totalorder %s20, 2
      %p76 = por %p74, %p75
      %p78 = scmp.ne.s32.totalorder %s63, %s77
      %p79 = scmp.eq.s32.totalorder %s20, 0
      %p80 = por %p78, %p79
      %s82 = sadd.s32 %s81, 1
      %p85 = scmp.eq.s32.totalorder %s14, 2
      %p86 = scmp.ne.s32.totalorder %s81, %s83
      %p87 = scmp.eq.s32.totalorder %s14, 0
      %p88 = por %p86, %p87
      %p89 = scmp.ne.s32.totalorder %s81, %s83
      %p90 = scmp.eq.s32.totalorder %s19, 2
      %p91 = por %p89, %p90
      %p92 = scmp.ne.s32.totalorder %s83, %s84
      %p93 = scmp.eq.s32.totalorder %s19, 0
      %p94 = por %p92, %p93
      %p95 = scmp.ne.s32.totalorder %s83, %s84
      %p96 = scmp.eq.s32.totalorder %s20, 2
      %p97 = por %p95, %p96
      %p99 = scmp.ne.s32.totalorder %s84, %s98
      %p100 = scmp.eq.s32.totalorder %s20, 0
      %p101 = por %p99, %p100
      %s103 = sadd.s32 %s102, 1
      %p106 = scmp.eq.s32.totalorder %s14, 2
      %p107 = scmp.ne.s32.totalorder %s102, %s104
      %p108 = scmp.eq.s32.totalorder %s14, 0
      %p109 = por %p107, %p108
      %p110 = scmp.ne.s32.totalorder %s102, %s104
      %p111 = scmp.eq.s32.totalorder %s19, 2
      %p112 = por %p110, %p111
      %p113 = scmp.ne.s32.totalorder %s104, %s105
      %p114 = scmp.eq.s32.totalorder %s19, 0
      %p115 = por %p113, %p114
      %p116 = scmp.ne.s32.totalorder %s104, %s105
      %p117 = scmp.eq.s32.totalorder %s20, 2
      %p118 = por %p116, %p117
      %p120 = scmp.ne.s32.totalorder %s105, %s119
      %p121 = scmp.eq.s32.totalorder %s20, 0
      %p122 = por %p120, %p121
      %s124 = sadd.s32 %s123, 1
      %p127 = scmp.eq.s32.totalorder %s14, 2
      %p128 = scmp.ne.s32.totalorder %s123, %s125
      %p129 = scmp.eq.s32.totalorder %s14, 0
      %p130 = por %p128, %p129
      %p131 = scmp.ne.s32.totalorder %s123, %s125
      %p132 = scmp.eq.s32.totalorder %s19, 2
      %p133 = por %p131, %p132
      %p134 = scmp.ne.s32.totalorder %s125, %s126
      %p135 = scmp.eq.s32.totalorder %s19, 0
      %p136 = por %p134, %p135
      %p137 = scmp.ne.s32.totalorder %s125, %s126
      %p138 = scmp.eq.s32.totalorder %s20, 2
      %p139 = por %p137, %p138
      %p141 = scmp.ne.s32.totalorder %s126, %s140
      %p142 = scmp.eq.s32.totalorder %s20, 0
      %p143 = por %p141, %p142
      %s145 = sadd.s32 %s144, 1
      %p148 = scmp.eq.s32.totalorder %s14, 2
      %p149 = scmp.ne.s32.totalorder %s144, %s146
      %p150 = scmp.eq.s32.totalorder %s14, 0
      %p151 = por %p149, %p150
      %p152 = scmp.ne.s32.totalorder %s144, %s146
      %p153 = scmp.eq.s32.totalorder %s19, 2
      %p154 = por %p152, %p153
      %p155 = scmp.ne.s32.totalorder %s146, %s147
      %p156 = scmp.eq.s32.totalorder %s19, 0
      %p157 = por %p155, %p156
      %p158 = scmp.ne.s32.totalorder %s146, %s147
      %p159 = scmp.eq.s32.totalorder %s20, 2
      %p160 = por %p158, %p159
      %p162 = scmp.ne.s32.totalorder %s147, %s161
      %p163 = scmp.eq.s32.totalorder %s20, 0
      %p164 = por %p162, %p163
      %p165 = scmp.eq.s32.totalorder %s21, 2
      %s166 = scalar_select %p165, %s22, 0
      %p167 = scmp.eq.s32.totalorder %s33, 2
      %s168 = scalar_select %p167, %s29, 0
      %s169 = ssub.s32 %s166, %s168
      %p170 = scmp.eq.s32.totalorder %s169, 0
      %s172 = sadd.s32 %s171, 1
      %s173 = scalar_select %p170, %s171, %s172
      %p176 = pneg %p170
      %p177 = scmp.eq.s32.totalorder %s14, 2
      %p178 = por %p176, %p177
      %p179 = scmp.ne.s32.totalorder %s171, %s174
      %p180 = scmp.eq.s32.totalorder %s14, 0
      %p181 = por %p179, %p180
      %p182 = scmp.ne.s32.totalorder %s171, %s174
      %p183 = scmp.eq.s32.totalorder %s19, 2
      %p184 = por %p182, %p183
      %p185 = scmp.ne.s32.totalorder %s174, %s175
      %p186 = scmp.eq.s32.totalorder %s19, 0
      %p187 = por %p185, %p186
      %p188 = scmp.ne.s32.totalorder %s174, %s175
      %p189 = scmp.eq.s32.totalorder %s20, 2
      %p190 = por %p188, %p189
      %p192 = scmp.ne.s32.totalorder %s175, %s191
      %p193 = scmp.eq.s32.totalorder %s20, 0
      %p194 = por %p192, %p193
      %p195 = scmp.le.s32.totalorder 1, %s14
      %p196 = scmp.lt.s32.totalorder %s14, 4
      %p197 = pnand %p195, %p196
      %p198 = pneg %p197
      // Predicated region
      $region9: #{generator_forward.1} parent=5 // pred_check
        _
      $region10: #{generator_forward.1} parent=5 // pred_check_branch
        %200 = sbr.rel (%p197) target = $region12
      $region11: #{generator_forward.1} parent=5 // pred_region
        %s201 = ssub.s32 %s14, 1
        // Predicated region
        $region13: #{generator_forward.1} parent=11 // pred_check
          %p202 = pneg %p52
        $region14: #{generator_forward.1} parent=11 // pred_check_branch
          %204 = sbr.rel (%p202) target = $region16
        $region15: #{generator_forward.1} parent=11 // pred_region
          %s205 = smul.u32 2, %s24
          %p206 = scmp.lt.s32.totalorder %s205, 1
          %s207 = scalar_select %p206, %s205, 1
          %s208 = smul.addr %s207, 4
          %s209 = scalar_lea.vmem %s0, %s208
          %s210 = smul.u32 2, %s24
        $region16: #{generator_forward.1} parent=11 // pred_fallthru
          _
        // Predicated region
        $region17: #{generator_forward.1} parent=11 // pred_check
          %p211 = pneg %p73
        $region18: #{generator_forward.1} parent=11 // pred_check_branch
          %213 = sbr.rel (%p211) target = $region20
        $region19: #{generator_forward.1} parent=11 // pred_region
          _
        $region20: #{generator_forward.1} parent=11 // pred_fallthru
          _
        // Predicated region
        $region21: #{generator_forward.1} parent=11 // pred_check
          %p214 = pneg %p94
        $region22: #{generator_forward.1} parent=11 // pred_check_branch
          %216 = sbr.rel (%p214) target = $region24
        $region23: #{generator_forward.1} parent=11 // pred_region
          %s218 = ssub.s32 4096, 4096
          %219 = vsyncadd [#allocation7], %s218
          %s220 = sshll.u32 [#allocation6], 4
          %s221 = int_to_ptr.vmem [resolvable:$true] %s220
          %226 = dma.hbm_to_vmem [thread:$0]  %s2, 4096, %s221, [#allocation7], 128, 128, 8
        $region24: #{generator_forward.1} parent=11 // pred_fallthru
          _
        // Predicated region
        $region25: #{generator_forward.1} parent=11 // pred_check
          %p227 = pneg %p115
        $region26: #{generator_forward.1} parent=11 // pred_check_branch
          %229 = sbr.rel (%p227) target = $region28
        $region27: #{generator_forward.1} parent=11 // pred_region
          %s231 = ssub.s32 4096, 4096
          %232 = vsyncadd [#allocation9], %s231
          %s233 = sshll.u32 [#allocation8], 4
          %s234 = int_to_ptr.vmem [resolvable:$true] %s233
          %239 = dma.hbm_to_vmem [thread:$0]  %s3, 4096, %s234, [#allocation9], 128, 128, 8
        $region28: #{generator_forward.1} parent=11 // pred_fallthru
          _
        // Predicated region
        $region29: #{generator_forward.1} parent=11 // pred_check
          %p240 = pneg %p136
        $region30: #{generator_forward.1} parent=11 // pred_check_branch
          %242 = sbr.rel (%p240) target = $region32
        $region31: #{generator_forward.1} parent=11 // pred_region
          %s244 = ssub.s32 256, 256
          %245 = vsyncadd [#allocation9], %s244
          %s247 = sshll.u32 [#allocation10], 4
          %s248 = int_to_ptr.vmem [resolvable:$true] %s247
          %250 = dma.hbm_to_vmem [thread:$0]  %s4, 256, %s248, [#allocation9]
        $region32: #{generator_forward.1} parent=11 // pred_fallthru
          _
        // Predicated region
        $region33: #{generator_forward.1} parent=11 // pred_check
          %p251 = pneg %p157
        $region34: #{generator_forward.1} parent=11 // pred_check_branch
          %253 = sbr.rel (%p251) target = $region36
        $region35: #{generator_forward.1} parent=11 // pred_region
          _
        $region36: #{generator_forward.1} parent=11 // pred_fallthru
          _
      $region12: #{generator_forward.1} parent=5 // pred_fallthru
        _
      %p254 = scmp.lt.s32.totalorder %s14, 3
      // Predicated region
      $region37: #{generator_forward.1} parent=5 // pred_check
        %p255 = pneg %p254
      $region38: #{generator_forward.1} parent=5 // pred_check_branch
        %257 = sbr.rel (%p255) target = $region40
      $region39: #{generator_forward.1} parent=5 // pred_region
        _
      $region40: #{generator_forward.1} parent=5 // pred_fallthru
        _
      %p258 = scmp.le.s32.totalorder 1, %s14
      %p259 = scmp.lt.s32.totalorder %s14, 4
      %p260 = pnand %p258, %p259
      %p261 = pneg %p260
      // Predicated region
      $region41: #{generator_forward.1} parent=5 // pred_check
        _
      $region42: #{generator_forward.1} parent=5 // pred_check_branch
        %263 = sbr.rel (%p260) target = $region44
      $region43: #{generator_forward.1} parent=5 // pred_region
        %s264 = ssub.s32 %s14, 1
        // Predicated region
        $region45: #{generator_forward.1} parent=43 // pred_check
          %p265 = pneg %p94
        $region46: #{generator_forward.1} parent=43 // pred_check_branch
          %267 = sbr.rel (%p265) target = $region48
        $region47: #{generator_forward.1} parent=43 // pred_region
          %268 = dma.done [#allocation7], 4096
        $region48: #{generator_forward.1} parent=43 // pred_fallthru
          _
        // Predicated region
        $region49: #{generator_forward.1} parent=43 // pred_check
          %p269 = pneg %p115
        $region50: #{generator_forward.1} parent=43 // pred_check_branch
          %271 = sbr.rel (%p269) target = $region52
        $region51: #{generator_forward.1} parent=43 // pred_region
          %272 = dma.done [#allocation9], 4096
        $region52: #{generator_forward.1} parent=43 // pred_fallthru
          _
        // Predicated region
        $region53: #{generator_forward.1} parent=43 // pred_check
          %p273 = pneg %p136
        $region54: #{generator_forward.1} parent=43 // pred_check_branch
          %275 = sbr.rel (%p273) target = $region56
        $region55: #{generator_forward.1} parent=43 // pred_region
          %276 = dma.done [#allocation9], 256
        $region56: #{generator_forward.1} parent=43 // pred_fallthru
          _
        %s277 = smul.u32 2, %s24
        %p278 = scmp.lt.s32.totalorder %s277, 1
        %s279 = scalar_select %p278, %s277, 1
        %s280 = smul.addr %s279, 4
        %s281 = scalar_lea.vmem %s0, %s280
        %p282 = pneg %p52
        %p283 = pneg %p49
        %p284 = pneg %p73
        %p285 = pneg %p70
        %p286 = pneg %p94
        %p287 = pneg %p91
        %p288 = pneg %p115
        %p289 = pneg %p112
        %p290 = pneg %p136
        %p291 = pneg %p133
        %p292 = pneg %p157
        %p293 = pneg %p154
        %p294 = pneg %p187
        %p295 = pneg %p184
        %p296 = scmp.eq.s32.totalorder %s23, 2
        %s297 = scalar_select %p296, %s24, 0
        %s298 = smul.u32 2, %s297
        %p299 = scmp.lt.s32.totalorder %s298, 1
        %s300 = scalar_select %p299, %s298, 1
        %s301 = smul.addr %s300, 2
        %s302 = smul.addr %s301, 8
        %s303 = scalar_lea.vmem %s6, %s302
        %s304 = smul.u32 2, %s24
        %p305 = scmp.lt.s32.totalorder %s304, 1
        %s306 = scalar_select %p305, %s304, 1
        %s307 = smul.addr %s306, 4
        %s308 = scalar_lea.vmem %s0, %s307
        %s309 = smul.u32 2, %s24
        %p310 = scmp.eq.s32.totalorder %s23, 2
        %s311 = scalar_select %p310, %s24, 0
        %s312 = smul.u32 2, %s311
        %p313 = scmp.lt.s32.totalorder %s312, 1
        %s314 = scalar_select %p313, %s312, 1
        %s315 = smul.addr %s314, 2
        %s316 = smul.addr %s315, 8
        %s317 = scalar_lea.vmem %s6, %s316
        %p318 = scmp.eq.s32.totalorder %s23, 2
        %s319 = scalar_select %p318, %s24, 0
        %s320 = smul.u32 2, %s319
        %p322 = scmp.eq.s32.totalorder %s23, 0
        // Predicated region
        $region57: #{generator_forward.1} parent=43 // pred_check
          %p323 = pneg %p322
        $region58: #{generator_forward.1} parent=43 // pred_check_branch
          %325 = sbr.rel (%p323) target = $region60
        $region59: #{generator_forward.1} parent=43 // pred_region
          %p326 = scmp.eq.s32.totalorder %s24, 0
          // Predicated region
          $region61: #{generator_forward.1} parent=59 // pred_check
            %p327 = pneg %p326
          $region62: #{generator_forward.1} parent=59 // pred_check_branch
            %329 = sbr.rel (%p327) target = $region64
          $region63: #{generator_forward.1} parent=59 // pred_region
            %330 = vst [vmem:[#allocation2] sm:$0xf] 0.0
            %331 = vst [vmem:[#allocation3] sm:$0xf] 0.0
          $region64: #{generator_forward.1} parent=59 // pred_fallthru
            _
          %v332 = vld [vmem:[%s308] sm:$0xf]
          %v333 = vld [vmem:[%s308 + $0x4] sm:$0xf]
          %v334 = vld [vmem:[%s1] sm:$0xff]
          %v335 = vld [vmem:[%s1 + $0x8] sm:$0xff]
          %v336 = vld [vmem:[%s1 + $0x10] sm:$0xff]
          %v337 = vld [vmem:[%s1 + $0x18] sm:$0xff]
          %v340 = vunpack.c.l.b16 %v332
          %v341 = vunpack.c.l.b16 %v333
          %v342 = vpack.c.b16 %v341, %v340
          %v347 = vunpack.c.l.b16 %v334
          %v348 = vunpack.c.h.b16 %v334
          %v349 = vunpack.c.l.b16 %v335
          %v350 = vunpack.c.h.b16 %v335
          %v351 = vunpack.c.l.b16 %v336
          %v352 = vunpack.c.h.b16 %v336
          %v353 = vunpack.c.l.b16 %v337
          %v354 = vunpack.c.h.b16 %v337
          %v355 = vpack.c.b16 %v349, %v347
          %v356 = vpack.c.b16 %v350, %v348
          %v357 = vpack.c.b16 %v353, %v351
          %v358 = vpack.c.b16 %v354, %v352
          %vm363 = vcmask 261120
          %v365 = vsel %vm363, %v342, 0
          %367 = vmatprep.subr.bf16.mxu0 %v356
          %368 = vmatpush1.bf16.msra.mxu0 %v355
          %369 = vmatprep.subr.bf16.mxu0 %v358
          %370 = vmatpush1.bf16.msra.mxu0 %v357
          %371 = vmatprep.subr.bf16.mxu0 0
          %372 = vmatpush1.bf16.msra.mxu0 0
          %373 = vmatprep.subr.bf16.mxu0 0
          %374 = vmatpush1.bf16.msra.mxu0 0
          %375 = vmatprep.subr.bf16.mxu0 0
          %376 = vmatpush1.bf16.msra.mxu0 0
          %377 = vmatprep.subr.bf16.mxu0 0
          %378 = vmatpush1.bf16.msra.mxu0 0
          %379 = vmatprep.subr.bf16.mxu0 0
          %380 = vmatpush1.bf16.msra.mxu0 0
          %381 = vmatprep.subr.bf16.mxu0 0
          %382 = vmatpush1.bf16.msra.mxu0 0
          %383 = vmatprep.subr.bf16.mxu0 0
          %384 = vmatpush1.bf16.msra.mxu0 0
          %385 = vmatprep.subr.bf16.mxu0 0
          %386 = vmatpush1.bf16.msra.mxu0 0
          %387 = vmatprep.subr.bf16.mxu0 0
          %388 = vmatpush1.bf16.msra.mxu0 0
          %389 = vmatprep.subr.bf16.mxu0 0
          %390 = vmatpush1.bf16.msra.mxu0 0
          %391 = vmatprep.subr.bf16.mxu0 0
          %392 = vmatpush1.bf16.msra.mxu0 0
          %393 = vmatprep.subr.bf16.mxu0 0
          %394 = vmatpush1.bf16.msra.mxu0 0
          %395 = vmatprep.subr.bf16.mxu0 0
          %396 = vmatpush1.bf16.msra.mxu0 0
          %397 = vmatprep.subr.bf16.mxu0 0
          %398 = vmatpush1.bf16.msra.mxu0 0
          %399 = vmatprep.mubr.bf16.mxu0 0
          %400 = vmatmul.mubr.bf16.gmra.mrb[0].mxu0 %v365
          %v401 = vpop.f32.mrb[0].mxu0
          %v402 = vadd.f32 0.0, %v401
          %v403 = vpop.f32.mrb[0].mxu0
          %v404 = vadd.f32 0.0, %v403
          %v405 = vpop.f32.mrb[0].mxu0
          %v406 = vadd.f32 0.0, %v405
          %v407 = vpop.f32.mrb[0].mxu0
          %v408 = vadd.f32 0.0, %v407
          %409 = vdwg.mxu0
          %v410 = vlaneseq
          %v411 = vshrl.u32 %v410, 7
          %v412 = vadd.s32 %v411, 8
          %s413 = smul.u32 %s24, 16
          %v414 = vstv %s413
          %v415 = vadd.s32 %v411, %v414
          %v416 = vadd.s32 %v412, %v414
          %vm417 = vcmp.lt.s32.totalorder %v415, 8
          %vm418 = vcmp.lt.s32.totalorder %v416, 8
          %v419 = vsel %vm417, 1, 0
          %v420 = vsel %vm418, 1, 0
          %vm421 = vcmp.eq.s32.totalorder %v419, 1
          %vm422 = vcmp.eq.s32.totalorder %v420, 1
          %v423 = vsel %vm421, %v402, 0.0
          %v424 = vsel %vm421, %v404, 0.0
          %v425 = vsel %vm422, %v406, 0.0
          %v426 = vsel %vm422, %v408, 0.0
          %v427 = vld [vmem:[#allocation2] ss:$2 sm:$0x3]
          %v428 = vadd.f32 %v423, %v425
          %v429 = vrot.slane %v428, 4
          %v430 = vadd.f32 %v428, %v429
          %v431 = vrot.slane %v430, 2
          %v432 = vadd.f32 %v430, %v431
          %v433 = vrot.slane %v432, 1
          %v434 = vadd.f32 %v432, %v433
          %v435 = vadd.f32 %v424, %v426
          %v436 = vrot.slane %v435, 4
          %v437 = vadd.f32 %v435, %v436
          %v438 = vrot.slane %v437, 2
          %v439 = vadd.f32 %v437, %v438
          %v440 = vrot.slane %v439, 1
          %v441 = vadd.f32 %v439, %v440
          %v444 = vcombine.low %v434, %v441
          %v446 = vunpack.c.l.s4 1966171168
          %v447 = vunpack.c.0.s8 %v446
          %v448 = vlaneseq
          %v449 = vshrl.u32 %v448, 7
          %v450 = vsub.s32 %v447, %v449
          %v451 = vrot.slane %v444, %v450
          %v453 = vunpack.c.l.s4 1966171168
          %v454 = vunpack.c.0.s8 %v453
          %v455 = vlaneseq
          %v456 = vshrl.u32 %v455, 7
          %v457 = vsub.s32 %v454, %v456
          %v458 = vrot.slane %v451, %v457
          %v460 = vadd.f32 %v427, %v458
          %v461 = vlaneseq
          %vm462 = vcmp.ge.s32.totalorder %v461, 0
          %vm463 = vcmp.lt.s32.totalorder %v461, 256
          %vm464 = vmand %vm462, %vm463
          %465 = vst.msk [vmem:[#allocation2] ss:$2 sm:$0x3] %vm464, %v460
          %s466 = scalar_lea.vmem [#allocation2], 1
          %v467 = vld [vmem:[%s466] ss:$2 sm:$0x3]
          %v468 = vmul.f32 %v423, %v423
          %v469 = vmul.f32 %v424, %v424
          %v470 = vmul.f32 %v425, %v425
          %v471 = vmul.f32 %v426, %v426
          %v472 = vadd.f32 %v468, %v470
          %v473 = vrot.slane %v472, 4
          %v474 = vadd.f32 %v472, %v473
          %v475 = vrot.slane %v474, 2
          %v476 = vadd.f32 %v474, %v475
          %v477 = vrot.slane %v476, 1
          %v478 = vadd.f32 %v476, %v477
          %v479 = vadd.f32 %v469, %v471
          %v480 = vrot.slane %v479, 4
          %v481 = vadd.f32 %v479, %v480
          %v482 = vrot.slane %v481, 2
          %v483 = vadd.f32 %v481, %v482
          %v484 = vrot.slane %v483, 1
          %v485 = vadd.f32 %v483, %v484
          %v488 = vcombine.low %v478, %v485
          %v490 = vunpack.c.l.s4 1966171168
          %v491 = vunpack.c.0.s8 %v490
          %v492 = vlaneseq
          %v493 = vshrl.u32 %v492, 7
          %v494 = vsub.s32 %v491, %v493
          %v495 = vrot.slane %v488, %v494
          %v497 = vunpack.c.l.s4 1966171168
          %v498 = vunpack.c.0.s8 %v497
          %v499 = vlaneseq
          %v500 = vshrl.u32 %v499, 7
          %v501 = vsub.s32 %v498, %v500
          %v502 = vrot.slane %v495, %v501
          %v504 = vadd.f32 %v467, %v502
          %505 = vst.msk [vmem:[%s466] ss:$2 sm:$0x3] %vm464, %v504
          // Predicated region
          $region65: #{generator_forward.1} parent=59 // pred_check
            %p506 = pneg %p326
          $region66: #{generator_forward.1} parent=59 // pred_check_branch
            %508 = sbr.rel (%p506) target = $region68
          $region67: #{generator_forward.1} parent=59 // pred_region
            %v509 = vld [vmem:[#allocation10] ss:$8 sm:$0x3]
            %s510 = scalar_lea.vmem [#allocation10], 1
            %v511 = vld [vmem:[%s510] ss:$8 sm:$0x3]
            %v512 = vld [vmem:[#allocation2] ss:$2 sm:$0x3]
            %v513 = vmul.f32 %v512, 0.125
            %v514 = vld [vmem:[%s466] ss:$2 sm:$0x3]
            %v515 = vmul.f32 %v514, 0.125
            %v516 = vmul.f32 %v513, %v513
            %v517 = vsub.f32 %v515, %v516
            %v518 = vadd.f32 %v517, 1e-05
            %v519 = vrsqrt.pop %v518
            %v520 = vmul.f32 %v509, %v519
            %521 = vst.msk [vmem:[#allocation4] ss:$2 sm:$0x3] %vm464, %v520
            %v522 = vmul.f32 %v513, %v520
            %v523 = vsub.f32 %v511, %v522
            %s524 = scalar_lea.vmem [#allocation4], 1
            %525 = vst.msk [vmem:[%s524] ss:$2 sm:$0x3] %vm464, %v523
          $region68: #{generator_forward.1} parent=59 // pred_fallthru
            _
        $region60: #{generator_forward.1} parent=43 // pred_fallthru
          _
        %p526 = scmp.eq.s32.totalorder %s23, 1
        // Predicated region
        $region69: #{generator_forward.1} parent=43 // pred_check
          %p527 = pneg %p526
        $region70: #{generator_forward.1} parent=43 // pred_check_branch
          %529 = sbr.rel (%p527) target = $region72
        $region71: #{generator_forward.1} parent=43 // pred_region
          %v530 = vld [vmem:[%s308] sm:$0xf]
          %v531 = vld [vmem:[%s308 + $0x4] sm:$0xf]
          %v532 = vld [vmem:[%s1] sm:$0xff]
          %v533 = vld [vmem:[%s1 + $0x8] sm:$0xff]
          %v534 = vld [vmem:[%s1 + $0x10] sm:$0xff]
          %v535 = vld [vmem:[%s1 + $0x18] sm:$0xff]
          %v538 = vunpack.c.l.b16 %v530
          %v539 = vunpack.c.l.b16 %v531
          %v540 = vpack.c.b16 %v539, %v538
          %v545 = vunpack.c.l.b16 %v532
          %v546 = vunpack.c.h.b16 %v532
          %v547 = vunpack.c.l.b16 %v533
          %v548 = vunpack.c.h.b16 %v533
          %v549 = vunpack.c.l.b16 %v534
          %v550 = vunpack.c.h.b16 %v534
          %v551 = vunpack.c.l.b16 %v535
          %v552 = vunpack.c.h.b16 %v535
          %v553 = vpack.c.b16 %v547, %v545
          %v554 = vpack.c.b16 %v548, %v546
          %v555 = vpack.c.b16 %v551, %v549
          %v556 = vpack.c.b16 %v552, %v550
          %vm561 = vcmask 261120
          %v563 = vsel %vm561, %v540, 0
          %565 = vmatprep.subr.bf16.mxu0 %v554
          %566 = vmatpush1.bf16.msra.mxu0 %v553
          %567 = vmatprep.subr.bf16.mxu0 %v556
          %568 = vmatpush1.bf16.msra.mxu0 %v555
          %569 = vmatprep.subr.bf16.mxu0 0
          %570 = vmatpush1.bf16.msra.mxu0 0
          %571 = vmatprep.subr.bf16.mxu0 0
          %572 = vmatpush1.bf16.msra.mxu0 0
          %573 = vmatprep.subr.bf16.mxu0 0
          %574 = vmatpush1.bf16.msra.mxu0 0
          %575 = vmatprep.subr.bf16.mxu0 0
          %576 = vmatpush1.bf16.msra.mxu0 0
          %577 = vmatprep.subr.bf16.mxu0 0
          %578 = vmatpush1.bf16.msra.mxu0 0
          %579 = vmatprep.subr.bf16.mxu0 0
          %580 = vmatpush1.bf16.msra.mxu0 0
          %581 = vmatprep.subr.bf16.mxu0 0
          %582 = vmatpush1.bf16.msra.mxu0 0
          %583 = vmatprep.subr.bf16.mxu0 0
          %584 = vmatpush1.bf16.msra.mxu0 0
          %585 = vmatprep.subr.bf16.mxu0 0
          %586 = vmatpush1.bf16.msra.mxu0 0
          %587 = vmatprep.subr.bf16.mxu0 0
          %588 = vmatpush1.bf16.msra.mxu0 0
          %589 = vmatprep.subr.bf16.mxu0 0
          %590 = vmatpush1.bf16.msra.mxu0 0
          %591 = vmatprep.subr.bf16.mxu0 0
          %592 = vmatpush1.bf16.msra.mxu0 0
          %593 = vmatprep.subr.bf16.mxu0 0
          %594 = vmatpush1.bf16.msra.mxu0 0
          %595 = vmatprep.subr.bf16.mxu0 0
          %596 = vmatpush1.bf16.msra.mxu0 0
          %597 = vmatprep.mubr.bf16.mxu0 0
          %598 = vmatmul.mubr.bf16.gmra.mrb[0].mxu0 %v563
          %v599 = vpop.f32.mrb[0].mxu0
          %v600 = vadd.f32 0.0, %v599
          %v601 = vpop.f32.mrb[0].mxu0
          %v602 = vadd.f32 0.0, %v601
          %v603 = vpop.f32.mrb[0].mxu0
          %v604 = vadd.f32 0.0, %v603
          %v605 = vpop.f32.mrb[0].mxu0
          %v606 = vadd.f32 0.0, %v605
          %607 = vdwg.mxu0
          %v608 = vld [vmem:[#allocation4] ss:$2 sm:$0x3]
          %v610 = vlaneseq
          %v611 = vshrl.u32 %v610, 7
          %v612 = vsub.s32 0, %v611
          %v613 = vrot.slane %v608, %v612
          %v614 = vlaneseq
          %v615 = vshrl.u32 %v614, 7
          %v616 = vsub.s32 1, %v615
          %v617 = vrot.slane %v608, %v616
          %v620 = vmul.f32 %v600, %v613
          %v621 = vmul.f32 %v602, %v617
          %v622 = vmul.f32 %v604, %v613
          %v623 = vmul.f32 %v606, %v617
          %s624 = scalar_lea.vmem [#allocation4], 1
          %v625 = vld [vmem:[%s624] ss:$2 sm:$0x3]
          %v627 = vlaneseq
          %v628 = vshrl.u32 %v627, 7
          %v629 = vsub.s32 0, %v628
          %v630 = vrot.slane %v625, %v629
          %v631 = vlaneseq
          %v632 = vshrl.u32 %v631, 7
          %v633 = vsub.s32 1, %v632
          %v634 = vrot.slane %v625, %v633
          %v637 = vadd.f32 %v620, %v630
          %v638 = vadd.f32 %v621, %v634
          %v639 = vadd.f32 %v622, %v630
          %v640 = vadd.f32 %v623, %v634
          %v641 = vmax.f32 %v637, 0.0
          %v642 = vmax.f32 %v638, 0.0
          %v643 = vmax.f32 %v639, 0.0
          %v644 = vmax.f32 %v640, 0.0
          %v645 = vpack.c.bf16 %v643, %v641
          %v646 = vpack.c.bf16 %v644, %v642
          %v647 = vld [vmem:[#allocation6] sm:$0xff]
          %v648 = vld [vmem:[#allocation6 + $0x8] sm:$0xff]
          %v649 = vld [vmem:[#allocation6 + $0x10] sm:$0xff]
          %v650 = vld [vmem:[#allocation6 + $0x18] sm:$0xff]
          %v651 = vld [vmem:[#allocation6 + $0x20] sm:$0xff]
          %v652 = vld [vmem:[#allocation6 + $0x28] sm:$0xff]
          %v653 = vld [vmem:[#allocation6 + $0x30] sm:$0xff]
          %v654 = vld [vmem:[#allocation6 + $0x38] sm:$0xff]
          %v655 = vld [vmem:[#allocation6 + $0x40] sm:$0xff]
          %v656 = vld [vmem:[#allocation6 + $0x48] sm:$0xff]
          %v657 = vld [vmem:[#allocation6 + $0x50] sm:$0xff]
          %v658 = vld [vmem:[#allocation6 + $0x58] sm:$0xff]
          %v659 = vld [vmem:[#allocation6 + $0x60] sm:$0xff]
          %v660 = vld [vmem:[#allocation6 + $0x68] sm:$0xff]
          %v661 = vld [vmem:[#allocation6 + $0x70] sm:$0xff]
          %v662 = vld [vmem:[#allocation6 + $0x78] sm:$0xff]
          %v663 = vld [vmem:[#allocation6 + $0x80] sm:$0xff]
          %v664 = vld [vmem:[#allocation6 + $0x88] sm:$0xff]
          %v665 = vld [vmem:[#allocation6 + $0x90] sm:$0xff]
          %v666 = vld [vmem:[#allocation6 + $0x98] sm:$0xff]
          %v667 = vld [vmem:[#allocation6 + $0xa0] sm:$0xff]
          %v668 = vld [vmem:[#allocation6 + $0xa8] sm:$0xff]
          %v669 = vld [vmem:[#allocation6 + $0xb0] sm:$0xff]
          %v670 = vld [vmem:[#allocation6 + $0xb8] sm:$0xff]
          %v671 = vld [vmem:[#allocation6 + $0xc0] sm:$0xff]
          %v672 = vld [vmem:[#allocation6 + $0xc8] sm:$0xff]
          %v673 = vld [vmem:[#allocation6 + $0xd0] sm:$0xff]
          %v674 = vld [vmem:[#allocation6 + $0xd8] sm:$0xff]
          %v675 = vld [vmem:[#allocation6 + $0xe0] sm:$0xff]
          %v676 = vld [vmem:[#allocation6 + $0xe8] sm:$0xff]
          %v677 = vld [vmem:[#allocation6 + $0xf0] sm:$0xff]
          %v678 = vld [vmem:[#allocation6 + $0xf8] sm:$0xff]
          %v711 = vunpack.c.l.b16 %v647
          %v712 = vunpack.c.h.b16 %v647
          %v713 = vunpack.c.l.b16 %v648
          %v714 = vunpack.c.h.b16 %v648
          %v715 = vunpack.c.l.b16 %v649
          %v716 = vunpack.c.h.b16 %v649
          %v717 = vunpack.c.l.b16 %v650
          %v718 = vunpack.c.h.b16 %v650
          %v719 = vunpack.c.l.b16 %v651
          %v720 = vunpack.c.h.b16 %v651
          %v721 = vunpack.c.l.b16 %v652
          %v722 = vunpack.c.h.b16 %v652
          %v723 = vunpack.c.l.b16 %v653
          %v724 = vunpack.c.h.b16 %v653
          %v725 = vunpack.c.l.b16 %v654
          %v726 = vunpack.c.h.b16 %v654
          %v727 = vunpack.c.l.b16 %v655
          %v728 = vunpack.c.h.b16 %v655
          %v729 = vunpack.c.l.b16 %v656
          %v730 = vunpack.c.h.b16 %v656
          %v731 = vunpack.c.l.b16 %v657
          %v732 = vunpack.c.h.b16 %v657
          %v733 = vunpack.c.l.b16 %v658
          %v734 = vunpack.c.h.b16 %v658
          %v735 = vunpack.c.l.b16 %v659
          %v736 = vunpack.c.h.b16 %v659
          %v737 = vunpack.c.l.b16 %v660
          %v738 = vunpack.c.h.b16 %v660
          %v739 = vunpack.c.l.b16 %v661
          %v740 = vunpack.c.h.b16 %v661
          %v741 = vunpack.c.l.b16 %v662
          %v742 = vunpack.c.h.b16 %v662
          %v743 = vunpack.c.l.b16 %v663
          %v744 = vunpack.c.h.b16 %v663
          %v745 = vunpack.c.l.b16 %v664
          %v746 = vunpack.c.h.b16 %v664
          %v747 = vunpack.c.l.b16 %v665
          %v748 = vunpack.c.h.b16 %v665
          %v749 = vunpack.c.l.b16 %v666
          %v750 = vunpack.c.h.b16 %v666
          %v751 = vunpack.c.l.b16 %v667
          %v752 = vunpack.c.h.b16 %v667
          %v753 = vunpack.c.l.b16 %v668
          %v754 = vunpack.c.h.b16 %v668
          %v755 = vunpack.c.l.b16 %v669
          %v756 = vunpack.c.h.b16 %v669
          %v757 = vunpack.c.l.b16 %v670
          %v758 = vunpack.c.h.b16 %v670
          %v759 = vunpack.c.l.b16 %v671
          %v760 = vunpack.c.h.b16 %v671
          %v761 = vunpack.c.l.b16 %v672
          %v762 = vunpack.c.h.b16 %v672
          %v763 = vunpack.c.l.b16 %v673
          %v764 = vunpack.c.h.b16 %v673
          %v765 = vunpack.c.l.b16 %v674
          %v766 = vunpack.c.h.b16 %v674
          %v767 = vunpack.c.l.b16 %v675
          %v768 = vunpack.c.h.b16 %v675
          %v769 = vunpack.c.l.b16 %v676
          %v770 = vunpack.c.h.b16 %v676
          %v771 = vunpack.c.l.b16 %v677
          %v772 = vunpack.c.h.b16 %v677
          %v773 = vunpack.c.l.b16 %v678
          %v774 = vunpack.c.h.b16 %v678
          %v775 = vpack.c.b16 %v713, %v711
          %v776 = vpack.c.b16 %v714, %v712
          %v777 = vpack.c.b16 %v717, %v715
          %v778 = vpack.c.b16 %v718, %v716
          %v779 = vpack.c.b16 %v721, %v719
          %v780 = vpack.c.b16 %v722, %v720
          %v781 = vpack.c.b16 %v725, %v723
          %v782 = vpack.c.b16 %v726, %v724
          %v783 = vpack.c.b16 %v729, %v727
          %v784 = vpack.c.b16 %v730, %v728
          %v785 = vpack.c.b16 %v733, %v731
          %v786 = vpack.c.b16 %v734, %v732
          %v787 = vpack.c.b16 %v737, %v735
          %v788 = vpack.c.b16 %v738, %v736
          %v789 = vpack.c.b16 %v741, %v739
          %v790 = vpack.c.b16 %v742, %v740
          %v791 = vpack.c.b16 %v745, %v743
          %v792 = vpack.c.b16 %v746, %v744
          %v793 = vpack.c.b16 %v749, %v747
          %v794 = vpack.c.b16 %v750, %v748
          %v795 = vpack.c.b16 %v753, %v751
          %v796 = vpack.c.b16 %v754, %v752
          %v797 = vpack.c.b16 %v757, %v755
          %v798 = vpack.c.b16 %v758, %v756
          %v799 = vpack.c.b16 %v761, %v759
          %v800 = vpack.c.b16 %v762, %v760
          %v801 = vpack.c.b16 %v765, %v763
          %v802 = vpack.c.b16 %v766, %v764
          %v803 = vpack.c.b16 %v769, %v767
          %v804 = vpack.c.b16 %v770, %v768
          %v805 = vpack.c.b16 %v773, %v771
          %v806 = vpack.c.b16 %v774, %v772
          %839 = vmatprep.subr.bf16.mxu0 %v776
          %840 = vmatpush1.bf16.msra.mxu0 %v775
          %841 = vmatprep.subr.bf16.mxu0 %v778
          %842 = vmatpush1.bf16.msra.mxu0 %v777
          %843 = vmatprep.subr.bf16.mxu0 %v780
          %844 = vmatpush1.bf16.msra.mxu0 %v779
          %845 = vmatprep.subr.bf16.mxu0 %v782
          %846 = vmatpush1.bf16.msra.mxu0 %v781
          %847 = vmatprep.subr.bf16.mxu0 %v784
          %848 = vmatpush1.bf16.msra.mxu0 %v783
          %849 = vmatprep.subr.bf16.mxu0 %v786
          %850 = vmatpush1.bf16.msra.mxu0 %v785
          %851 = vmatprep.subr.bf16.mxu0 %v788
          %852 = vmatpush1.bf16.msra.mxu0 %v787
          %853 = vmatprep.subr.bf16.mxu0 %v790
          %854 = vmatpush1.bf16.msra.mxu0 %v789
          %855 = vmatprep.subr.bf16.mxu0 %v792
          %856 = vmatpush1.bf16.msra.mxu0 %v791
          %857 = vmatprep.subr.bf16.mxu0 %v794
          %858 = vmatpush1.bf16.msra.mxu0 %v793
          %859 = vmatprep.subr.bf16.mxu0 %v796
          %860 = vmatpush1.bf16.msra.mxu0 %v795
          %861 = vmatprep.subr.bf16.mxu0 %v798
          %862 = vmatpush1.bf16.msra.mxu0 %v797
          %863 = vmatprep.subr.bf16.mxu0 %v800
          %864 = vmatpush1.bf16.msra.mxu0 %v799
          %865 = vmatprep.subr.bf16.mxu0 %v802
          %866 = vmatpush1.bf16.msra.mxu0 %v801
          %867 = vmatprep.subr.bf16.mxu0 %v804
          %868 = vmatpush1.bf16.msra.mxu0 %v803
          %869 = vmatprep.subr.bf16.mxu0 %v806
          %870 = vmatpush1.bf16.msra.mxu0 %v805
          %871 = vmatprep.mubr.bf16.mxu0 %v646
          %872 = vmatmul.mubr.bf16.gmra.mrb[0].mxu0 %v645
          %v873 = vpop.f32.mrb[0].mxu0
          %v874 = vadd.f32 0.0, %v873
          %v875 = vpop.f32.mrb[0].mxu0
          %v876 = vadd.f32 0.0, %v875
          %v877 = vpop.f32.mrb[0].mxu0
          %v878 = vadd.f32 0.0, %v877
          %v879 = vpop.f32.mrb[0].mxu0
          %v880 = vadd.f32 0.0, %v879
          %881 = vdwg.mxu0
          %v882 = vlaneseq
          %v883 = vshrl.u32 %v882, 7
          %v884 = vadd.s32 %v883, 8
          %s885 = smul.u32 %s24, 16
          %v886 = vstv %s885
          %v887 = vadd.s32 %v883, %v886
          %v888 = vadd.s32 %v884, %v886
          %vm889 = vcmp.lt.s32.totalorder %v887, 8
          %vm890 = vcmp.lt.s32.totalorder %v888, 8
          %v891 = vsel %vm889, 1, 0
          %v892 = vsel %vm890, 1, 0
          %vm893 = vcmp.eq.s32.totalorder %v891, 1
          %vm894 = vcmp.eq.s32.totalorder %v892, 1
          %v895 = vsel %vm893, %v874, 0.0
          %v896 = vsel %vm893, %v876, 0.0
          %v897 = vsel %vm894, %v878, 0.0
          %v898 = vsel %vm894, %v880, 0.0
          %v899 = vld [vmem:[#allocation3] ss:$2 sm:$0x3]
          %v900 = vadd.f32 %v895, %v897
          %v901 = vrot.slane %v900, 4
          %v902 = vadd.f32 %v900, %v901
          %v903 = vrot.slane %v902, 2
          %v904 = vadd.f32 %v902, %v903
          %v905 = vrot.slane %v904, 1
          %v906 = vadd.f32 %v904, %v905
          %v907 = vadd.f32 %v896, %v898
          %v908 = vrot.slane %v907, 4
          %v909 = vadd.f32 %v907, %v908
          %v910 = vrot.slane %v909, 2
          %v911 = vadd.f32 %v909, %v910
          %v912 = vrot.slane %v911, 1
          %v913 = vadd.f32 %v911, %v912
          %v916 = vcombine.low %v906, %v913
          %v918 = vunpack.c.l.s4 1966171168
          %v919 = vunpack.c.0.s8 %v918
          %v920 = vlaneseq
          %v921 = vshrl.u32 %v920, 7
          %v922 = vsub.s32 %v919, %v921
          %v923 = vrot.slane %v916, %v922
          %v925 = vunpack.c.l.s4 1966171168
          %v926 = vunpack.c.0.s8 %v925
          %v927 = vlaneseq
          %v928 = vshrl.u32 %v927, 7
          %v929 = vsub.s32 %v926, %v928
          %v930 = vrot.slane %v923, %v929
          %v932 = vadd.f32 %v899, %v930
          %v933 = vlaneseq
          %vm934 = vcmp.ge.s32.totalorder %v933, 0
          %vm935 = vcmp.lt.s32.totalorder %v933, 256
          %vm936 = vmand %vm934, %vm935
          %937 = vst.msk [vmem:[#allocation3] ss:$2 sm:$0x3] %vm936, %v932
          %s938 = scalar_lea.vmem [#allocation3], 1
          %v939 = vld [vmem:[%s938] ss:$2 sm:$0x3]
          %v940 = vmul.f32 %v895, %v895
          %v941 = vmul.f32 %v896, %v896
          %v942 = vmul.f32 %v897, %v897
          %v943 = vmul.f32 %v898, %v898
          %v944 = vadd.f32 %v940, %v942
          %v945 = vrot.slane %v944, 4
          %v946 = vadd.f32 %v944, %v945
          %v947 = vrot.slane %v946, 2
          %v948 = vadd.f32 %v946, %v947
          %v949 = vrot.slane %v948, 1
          %v950 = vadd.f32 %v948, %v949
          %v951 = vadd.f32 %v941, %v943
          %v952 = vrot.slane %v951, 4
          %v953 = vadd.f32 %v951, %v952
          %v954 = vrot.slane %v953, 2
          %v955 = vadd.f32 %v953, %v954
          %v956 = vrot.slane %v955, 1
          %v957 = vadd.f32 %v955, %v956
          %v960 = vcombine.low %v950, %v957
          %v962 = vunpack.c.l.s4 1966171168
          %v963 = vunpack.c.0.s8 %v962
          %v964 = vlaneseq
          %v965 = vshrl.u32 %v964, 7
          %v966 = vsub.s32 %v963, %v965
          %v967 = vrot.slane %v960, %v966
          %v969 = vunpack.c.l.s4 1966171168
          %v970 = vunpack.c.0.s8 %v969
          %v971 = vlaneseq
          %v972 = vshrl.u32 %v971, 7
          %v973 = vsub.s32 %v970, %v972
          %v974 = vrot.slane %v967, %v973
          %v976 = vadd.f32 %v939, %v974
          %977 = vst.msk [vmem:[%s938] ss:$2 sm:$0x3] %vm936, %v976
          %p978 = scmp.eq.s32.totalorder %s24, 0
          // Predicated region
          $region73: #{generator_forward.1} parent=71 // pred_check
            %p979 = pneg %p978
          $region74: #{generator_forward.1} parent=71 // pred_check_branch
            %981 = sbr.rel (%p979) target = $region76
          $region75: #{generator_forward.1} parent=71 // pred_region
            %s982 = scalar_lea.vmem [#allocation10], 2
            %v983 = vld [vmem:[%s982] ss:$8 sm:$0x3]
            %s984 = scalar_lea.vmem [#allocation10], 3
            %v985 = vld [vmem:[%s984] ss:$8 sm:$0x3]
            %v986 = vld [vmem:[#allocation3] ss:$2 sm:$0x3]
            %v987 = vmul.f32 %v986, 0.125
            %v988 = vld [vmem:[%s938] ss:$2 sm:$0x3]
            %v989 = vmul.f32 %v988, 0.125
            %v990 = vmul.f32 %v987, %v987
            %v991 = vsub.f32 %v989, %v990
            %v992 = vadd.f32 %v991, 1e-05
            %v993 = vrsqrt.pop %v992
            %v994 = vmul.f32 %v983, %v993
            %995 = vst.msk [vmem:[#allocation5] ss:$2 sm:$0x3] %vm936, %v994
            %v996 = vmul.f32 %v987, %v994
            %v997 = vsub.f32 %v985, %v996
            %s998 = scalar_lea.vmem [#allocation5], 1
            %999 = vst.msk [vmem:[%s998] ss:$2 sm:$0x3] %vm936, %v997
          $region76: #{generator_forward.1} parent=71 // pred_fallthru
            _
        $region72: #{generator_forward.1} parent=43 // pred_fallthru
          _
        %p1000 = scmp.eq.s32.totalorder %s23, 2
        // Predicated region
        $region77: #{generator_forward.1} parent=43 // pred_check
          %p1001 = pneg %p1000
        $region78: #{generator_forward.1} parent=43 // pred_check_branch
          %1003 = sbr.rel (%p1001) target = $region80
        $region79: #{generator_forward.1} parent=43 // pred_region
          %v1004 = vld [vmem:[%s308] sm:$0xf]
          %v1005 = vld [vmem:[%s308 + $0x4] sm:$0xf]
          %v1006 = vld [vmem:[%s1] sm:$0xff]
          %v1007 = vld [vmem:[%s1 + $0x8] sm:$0xff]
          %v1008 = vld [vmem:[%s1 + $0x10] sm:$0xff]
          %v1009 = vld [vmem:[%s1 + $0x18] sm:$0xff]
          %v1012 = vunpack.c.l.b16 %v1004
          %v1013 = vunpack.c.l.b16 %v1005
          %v1014 = vpack.c.b16 %v1013, %v1012
          %v1019 = vunpack.c.l.b16 %v1006
          %v1020 = vunpack.c.h.b16 %v1006
          %v1021 = vunpack.c.l.b16 %v1007
          %v1022 = vunpack.c.h.b16 %v1007
          %v1023 = vunpack.c.l.b16 %v1008
          %v1024 = vunpack.c.h.b16 %v1008
          %v1025 = vunpack.c.l.b16 %v1009
          %v1026 = vunpack.c.h.b16 %v1009
          %v1027 = vpack.c.b16 %v1021, %v1019
          %v1028 = vpack.c.b16 %v1022, %v1020
          %v1029 = vpack.c.b16 %v1025, %v1023
          %v1030 = vpack.c.b16 %v1026, %v1024
          %vm1035 = vcmask 261120
          %v1037 = vsel %vm1035, %v1014, 0
          %1039 = vmatprep.subr.bf16.mxu0 %v1028
          %1040 = vmatpush1.bf16.msra.mxu0 %v1027
          %1041 = vmatprep.subr.bf16.mxu0 %v1030
          %1042 = vmatpush1.bf16.msra.mxu0 %v1029
          %1043 = vmatprep.subr.bf16.mxu0 0
          %1044 = vmatpush1.bf16.msra.mxu0 0
          %1045 = vmatprep.subr.bf16.mxu0 0
          %1046 = vmatpush1.bf16.msra.mxu0 0
          %1047 = vmatprep.subr.bf16.mxu0 0
          %1048 = vmatpush1.bf16.msra.mxu0 0
          %1049 = vmatprep.subr.bf16.mxu0 0
          %1050 = vmatpush1.bf16.msra.mxu0 0
          %1051 = vmatprep.subr.bf16.mxu0 0
          %1052 = vmatpush1.bf16.msra.mxu0 0
          %1053 = vmatprep.subr.bf16.mxu0 0
          %1054 = vmatpush1.bf16.msra.mxu0 0
          %1055 = vmatprep.subr.bf16.mxu0 0
          %1056 = vmatpush1.bf16.msra.mxu0 0
          %1057 = vmatprep.subr.bf16.mxu0 0
          %1058 = vmatpush1.bf16.msra.mxu0 0
          %1059 = vmatprep.subr.bf16.mxu0 0
          %1060 = vmatpush1.bf16.msra.mxu0 0
          %1061 = vmatprep.subr.bf16.mxu0 0
          %1062 = vmatpush1.bf16.msra.mxu0 0
          %1063 = vmatprep.subr.bf16.mxu0 0
          %1064 = vmatpush1.bf16.msra.mxu0 0
          %1065 = vmatprep.subr.bf16.mxu0 0
          %1066 = vmatpush1.bf16.msra.mxu0 0
          %1067 = vmatprep.subr.bf16.mxu0 0
          %1068 = vmatpush1.bf16.msra.mxu0 0
          %1069 = vmatprep.subr.bf16.mxu0 0
          %1070 = vmatpush1.bf16.msra.mxu0 0
          %1071 = vmatprep.mubr.bf16.mxu0 0
          %1072 = vmatmul.mubr.bf16.gmra.mrb[0].mxu0 %v1037
          %v1073 = vpop.f32.mrb[0].mxu0
          %v1074 = vadd.f32 0.0, %v1073
          %v1075 = vpop.f32.mrb[0].mxu0
          %v1076 = vadd.f32 0.0, %v1075
          %v1077 = vpop.f32.mrb[0].mxu0
          %v1078 = vadd.f32 0.0, %v1077
          %v1079 = vpop.f32.mrb[0].mxu0
          %v1080 = vadd.f32 0.0, %v1079
          %1081 = vdwg.mxu0
          %v1082 = vld [vmem:[#allocation4] ss:$2 sm:$0x3]
          %v1084 = vlaneseq
          %v1085 = vshrl.u32 %v1084, 7
          %v1086 = vsub.s32 0, %v1085
          %v1087 = vrot.slane %v1082, %v1086
          %v1088 = vlaneseq
          %v1089 = vshrl.u32 %v1088, 7
          %v1090 = vsub.s32 1, %v1089
          %v1091 = vrot.slane %v1082, %v1090
          %v1094 = vmul.f32 %v1074, %v1087
          %v1095 = vmul.f32 %v1076, %v1091
          %v1096 = vmul.f32 %v1078, %v1087
          %v1097 = vmul.f32 %v1080, %v1091
          %s1098 = scalar_lea.vmem [#allocation4], 1
          %v1099 = vld [vmem:[%s1098] ss:$2 sm:$0x3]
          %v1101 = vlaneseq
          %v1102 = vshrl.u32 %v1101, 7
          %v1103 = vsub.s32 0, %v1102
          %v1104 = vrot.slane %v1099, %v1103
          %v1105 = vlaneseq
          %v1106 = vshrl.u32 %v1105, 7
          %v1107 = vsub.s32 1, %v1106
          %v1108 = vrot.slane %v1099, %v1107
          %v1111 = vadd.f32 %v1094, %v1104
          %v1112 = vadd.f32 %v1095, %v1108
          %v1113 = vadd.f32 %v1096, %v1104
          %v1114 = vadd.f32 %v1097, %v1108
          %v1115 = vmax.f32 %v1111, 0.0
          %v1116 = vmax.f32 %v1112, 0.0
          %v1117 = vmax.f32 %v1113, 0.0
          %v1118 = vmax.f32 %v1114, 0.0
          %v1119 = vpack.c.bf16 %v1117, %v1115
          %v1120 = vpack.c.bf16 %v1118, %v1116
          %v1121 = vld [vmem:[#allocation6] sm:$0xff]
          %v1122 = vld [vmem:[#allocation6 + $0x8] sm:$0xff]
          %v1123 = vld [vmem:[#allocation6 + $0x10] sm:$0xff]
          %v1124 = vld [vmem:[#allocation6 + $0x18] sm:$0xff]
          %v1125 = vld [vmem:[#allocation6 + $0x20] sm:$0xff]
          %v1126 = vld [vmem:[#allocation6 + $0x28] sm:$0xff]
          %v1127 = vld [vmem:[#allocation6 + $0x30] sm:$0xff]
          %v1128 = vld [vmem:[#allocation6 + $0x38] sm:$0xff]
          %v1129 = vld [vmem:[#allocation6 + $0x40] sm:$0xff]
          %v1130 = vld [vmem:[#allocation6 + $0x48] sm:$0xff]
          %v1131 = vld [vmem:[#allocation6 + $0x50] sm:$0xff]
          %v1132 = vld [vmem:[#allocation6 + $0x58] sm:$0xff]
          %v1133 = vld [vmem:[#allocation6 + $0x60] sm:$0xff]
          %v1134 = vld [vmem:[#allocation6 + $0x68] sm:$0xff]
          %v1135 = vld [vmem:[#allocation6 + $0x70] sm:$0xff]
          %v1136 = vld [vmem:[#allocation6 + $0x78] sm:$0xff]
          %v1137 = vld [vmem:[#allocation6 + $0x80] sm:$0xff]
          %v1138 = vld [vmem:[#allocation6 + $0x88] sm:$0xff]
          %v1139 = vld [vmem:[#allocation6 + $0x90] sm:$0xff]
          %v1140 = vld [vmem:[#allocation6 + $0x98] sm:$0xff]
          %v1141 = vld [vmem:[#allocation6 + $0xa0] sm:$0xff]
          %v1142 = vld [vmem:[#allocation6 + $0xa8] sm:$0xff]
          %v1143 = vld [vmem:[#allocation6 + $0xb0] sm:$0xff]
          %v1144 = vld [vmem:[#allocation6 + $0xb8] sm:$0xff]
          %v1145 = vld [vmem:[#allocation6 + $0xc0] sm:$0xff]
          %v1146 = vld [vmem:[#allocation6 + $0xc8] sm:$0xff]
          %v1147 = vld [vmem:[#allocation6 + $0xd0] sm:$0xff]
          %v1148 = vld [vmem:[#allocation6 + $0xd8] sm:$0xff]
          %v1149 = vld [vmem:[#allocation6 + $0xe0] sm:$0xff]
          %v1150 = vld [vmem:[#allocation6 + $0xe8] sm:$0xff]
          %v1151 = vld [vmem:[#allocation6 + $0xf0] sm:$0xff]
          %v1152 = vld [vmem:[#allocation6 + $0xf8] sm:$0xff]
          %v1185 = vunpack.c.l.b16 %v1121
          %v1186 = vunpack.c.h.b16 %v1121
          %v1187 = vunpack.c.l.b16 %v1122
          %v1188 = vunpack.c.h.b16 %v1122
          %v1189 = vunpack.c.l.b16 %v1123
          %v1190 = vunpack.c.h.b16 %v1123
          %v1191 = vunpack.c.l.b16 %v1124
          %v1192 = vunpack.c.h.b16 %v1124
          %v1193 = vunpack.c.l.b16 %v1125
          %v1194 = vunpack.c.h.b16 %v1125
          %v1195 = vunpack.c.l.b16 %v1126
          %v1196 = vunpack.c.h.b16 %v1126
          %v1197 = vunpack.c.l.b16 %v1127
          %v1198 = vunpack.c.h.b16 %v1127
          %v1199 = vunpack.c.l.b16 %v1128
          %v1200 = vunpack.c.h.b16 %v1128
          %v1201 = vunpack.c.l.b16 %v1129
          %v1202 = vunpack.c.h.b16 %v1129
          %v1203 = vunpack.c.l.b16 %v1130
          %v1204 = vunpack.c.h.b16 %v1130
          %v1205 = vunpack.c.l.b16 %v1131
          %v1206 = vunpack.c.h.b16 %v1131
          %v1207 = vunpack.c.l.b16 %v1132
          %v1208 = vunpack.c.h.b16 %v1132
          %v1209 = vunpack.c.l.b16 %v1133
          %v1210 = vunpack.c.h.b16 %v1133
          %v1211 = vunpack.c.l.b16 %v1134
          %v1212 = vunpack.c.h.b16 %v1134
          %v1213 = vunpack.c.l.b16 %v1135
          %v1214 = vunpack.c.h.b16 %v1135
          %v1215 = vunpack.c.l.b16 %v1136
          %v1216 = vunpack.c.h.b16 %v1136
          %v1217 = vunpack.c.l.b16 %v1137
          %v1218 = vunpack.c.h.b16 %v1137
          %v1219 = vunpack.c.l.b16 %v1138
          %v1220 = vunpack.c.h.b16 %v1138
          %v1221 = vunpack.c.l.b16 %v1139
          %v1222 = vunpack.c.h.b16 %v1139
          %v1223 = vunpack.c.l.b16 %v1140
          %v1224 = vunpack.c.h.b16 %v1140
          %v1225 = vunpack.c.l.b16 %v1141
          %v1226 = vunpack.c.h.b16 %v1141
          %v1227 = vunpack.c.l.b16 %v1142
          %v1228 = vunpack.c.h.b16 %v1142
          %v1229 = vunpack.c.l.b16 %v1143
          %v1230 = vunpack.c.h.b16 %v1143
          %v1231 = vunpack.c.l.b16 %v1144
          %v1232 = vunpack.c.h.b16 %v1144
          %v1233 = vunpack.c.l.b16 %v1145
          %v1234 = vunpack.c.h.b16 %v1145
          %v1235 = vunpack.c.l.b16 %v1146
          %v1236 = vunpack.c.h.b16 %v1146
          %v1237 = vunpack.c.l.b16 %v1147
          %v1238 = vunpack.c.h.b16 %v1147
          %v1239 = vunpack.c.l.b16 %v1148
          %v1240 = vunpack.c.h.b16 %v1148
          %v1241 = vunpack.c.l.b16 %v1149
          %v1242 = vunpack.c.h.b16 %v1149
          %v1243 = vunpack.c.l.b16 %v1150
          %v1244 = vunpack.c.h.b16 %v1150
          %v1245 = vunpack.c.l.b16 %v1151
          %v1246 = vunpack.c.h.b16 %v1151
          %v1247 = vunpack.c.l.b16 %v1152
          %v1248 = vunpack.c.h.b16 %v1152
          %v1249 = vpack.c.b16 %v1187, %v1185
          %v1250 = vpack.c.b16 %v1188, %v1186
          %v1251 = vpack.c.b16 %v1191, %v1189
          %v1252 = vpack.c.b16 %v1192, %v1190
          %v1253 = vpack.c.b16 %v1195, %v1193
          %v1254 = vpack.c.b16 %v1196, %v1194
          %v1255 = vpack.c.b16 %v1199, %v1197
          %v1256 = vpack.c.b16 %v1200, %v1198
          %v1257 = vpack.c.b16 %v1203, %v1201
          %v1258 = vpack.c.b16 %v1204, %v1202
          %v1259 = vpack.c.b16 %v1207, %v1205
          %v1260 = vpack.c.b16 %v1208, %v1206
          %v1261 = vpack.c.b16 %v1211, %v1209
          %v1262 = vpack.c.b16 %v1212, %v1210
          %v1263 = vpack.c.b16 %v1215, %v1213
          %v1264 = vpack.c.b16 %v1216, %v1214
          %v1265 = vpack.c.b16 %v1219, %v1217
          %v1266 = vpack.c.b16 %v1220, %v1218
          %v1267 = vpack.c.b16 %v1223, %v1221
          %v1268 = vpack.c.b16 %v1224, %v1222
          %v1269 = vpack.c.b16 %v1227, %v1225
          %v1270 = vpack.c.b16 %v1228, %v1226
          %v1271 = vpack.c.b16 %v1231, %v1229
          %v1272 = vpack.c.b16 %v1232, %v1230
          %v1273 = vpack.c.b16 %v1235, %v1233
          %v1274 = vpack.c.b16 %v1236, %v1234
          %v1275 = vpack.c.b16 %v1239, %v1237
          %v1276 = vpack.c.b16 %v1240, %v1238
          %v1277 = vpack.c.b16 %v1243, %v1241
          %v1278 = vpack.c.b16 %v1244, %v1242
          %v1279 = vpack.c.b16 %v1247, %v1245
          %v1280 = vpack.c.b16 %v1248, %v1246
          %1313 = vmatprep.subr.bf16.mxu0 %v1250
          %1314 = vmatpush1.bf16.msra.mxu0 %v1249
          %1315 = vmatprep.subr.bf16.mxu0 %v1252
          %1316 = vmatpush1.bf16.msra.mxu0 %v1251
          %1317 = vmatprep.subr.bf16.mxu0 %v1254
          %1318 = vmatpush1.bf16.msra.mxu0 %v1253
          %1319 = vmatprep.subr.bf16.mxu0 %v1256
          %1320 = vmatpush1.bf16.msra.mxu0 %v1255
          %1321 = vmatprep.subr.bf16.mxu0 %v1258
          %1322 = vmatpush1.bf16.msra.mxu0 %v1257
          %1323 = vmatprep.subr.bf16.mxu0 %v1260
          %1324 = vmatpush1.bf16.msra.mxu0 %v1259
          %1325 = vmatprep.subr.bf16.mxu0 %v1262
          %1326 = vmatpush1.bf16.msra.mxu0 %v1261
          %1327 = vmatprep.subr.bf16.mxu0 %v1264
          %1328 = vmatpush1.bf16.msra.mxu0 %v1263
          %1329 = vmatprep.subr.bf16.mxu0 %v1266
          %1330 = vmatpush1.bf16.msra.mxu0 %v1265
          %1331 = vmatprep.subr.bf16.mxu0 %v1268
          %1332 = vmatpush1.bf16.msra.mxu0 %v1267
          %1333 = vmatprep.subr.bf16.mxu0 %v1270
          %1334 = vmatpush1.bf16.msra.mxu0 %v1269
          %1335 = vmatprep.subr.bf16.mxu0 %v1272
          %1336 = vmatpush1.bf16.msra.mxu0 %v1271
          %1337 = vmatprep.subr.bf16.mxu0 %v1274
          %1338 = vmatpush1.bf16.msra.mxu0 %v1273
          %1339 = vmatprep.subr.bf16.mxu0 %v1276
          %1340 = vmatpush1.bf16.msra.mxu0 %v1275
          %1341 = vmatprep.subr.bf16.mxu0 %v1278
          %1342 = vmatpush1.bf16.msra.mxu0 %v1277
          %1343 = vmatprep.subr.bf16.mxu0 %v1280
          %1344 = vmatpush1.bf16.msra.mxu0 %v1279
          %1345 = vmatprep.mubr.bf16.mxu0 %v1120
          %1346 = vmatmul.mubr.bf16.gmra.mrb[0].mxu0 %v1119
          %v1347 = vpop.f32.mrb[0].mxu0
          %v1348 = vadd.f32 0.0, %v1347
          %v1349 = vpop.f32.mrb[0].mxu0
          %v1350 = vadd.f32 0.0, %v1349
          %v1351 = vpop.f32.mrb[0].mxu0
          %v1352 = vadd.f32 0.0, %v1351
          %v1353 = vpop.f32.mrb[0].mxu0
          %v1354 = vadd.f32 0.0, %v1353
          %1355 = vdwg.mxu0
          %v1356 = vld [vmem:[#allocation5] ss:$2 sm:$0x3]
          %v1358 = vlaneseq
          %v1359 = vshrl.u32 %v1358, 7
          %v1360 = vsub.s32 0, %v1359
          %v1361 = vrot.slane %v1356, %v1360
          %v1362 = vlaneseq
          %v1363 = vshrl.u32 %v1362, 7
          %v1364 = vsub.s32 1, %v1363
          %v1365 = vrot.slane %v1356, %v1364
          %v1368 = vmul.f32 %v1348, %v1361
          %v1369 = vmul.f32 %v1350, %v1365
          %v1370 = vmul.f32 %v1352, %v1361
          %v1371 = vmul.f32 %v1354, %v1365
          %s1372 = scalar_lea.vmem [#allocation5], 1
          %v1373 = vld [vmem:[%s1372] ss:$2 sm:$0x3]
          %v1375 = vlaneseq
          %v1376 = vshrl.u32 %v1375, 7
          %v1377 = vsub.s32 0, %v1376
          %v1378 = vrot.slane %v1373, %v1377
          %v1379 = vlaneseq
          %v1380 = vshrl.u32 %v1379, 7
          %v1381 = vsub.s32 1, %v1380
          %v1382 = vrot.slane %v1373, %v1381
          %v1385 = vadd.f32 %v1368, %v1378
          %v1386 = vadd.f32 %v1369, %v1382
          %v1387 = vadd.f32 %v1370, %v1378
          %v1388 = vadd.f32 %v1371, %v1382
          %v1389 = vmax.f32 %v1385, 0.0
          %v1390 = vmax.f32 %v1386, 0.0
          %v1391 = vmax.f32 %v1387, 0.0
          %v1392 = vmax.f32 %v1388, 0.0
          %v1393 = vpack.c.bf16 %v1391, %v1389
          %v1394 = vpack.c.bf16 %v1392, %v1390
          %v1395 = vld [vmem:[#allocation8] sm:$0xff]
          %v1396 = vld [vmem:[#allocation8 + $0x8] sm:$0xff]
          %v1397 = vld [vmem:[#allocation8 + $0x10] sm:$0xff]
          %v1398 = vld [vmem:[#allocation8 + $0x18] sm:$0xff]
          %v1399 = vld [vmem:[#allocation8 + $0x20] sm:$0xff]
          %v1400 = vld [vmem:[#allocation8 + $0x28] sm:$0xff]
          %v1401 = vld [vmem:[#allocation8 + $0x30] sm:$0xff]
          %v1402 = vld [vmem:[#allocation8 + $0x38] sm:$0xff]
          %v1403 = vld [vmem:[#allocation8 + $0x40] sm:$0xff]
          %v1404 = vld [vmem:[#allocation8 + $0x48] sm:$0xff]
          %v1405 = vld [vmem:[#allocation8 + $0x50] sm:$0xff]
          %v1406 = vld [vmem:[#allocation8 + $0x58] sm:$0xff]
          %v1407 = vld [vmem:[#allocation8 + $0x60] sm:$0xff]
          %v1408 = vld [vmem:[#allocation8 + $0x68] sm:$0xff]
          %v1409 = vld [vmem:[#allocation8 + $0x70] sm:$0xff]
          %v1410 = vld [vmem:[#allocation8 + $0x78] sm:$0xff]
          %v1411 = vld [vmem:[#allocation8 + $0x80] sm:$0xff]
          %v1412 = vld [vmem:[#allocation8 + $0x88] sm:$0xff]
          %v1413 = vld [vmem:[#allocation8 + $0x90] sm:$0xff]
          %v1414 = vld [vmem:[#allocation8 + $0x98] sm:$0xff]
          %v1415 = vld [vmem:[#allocation8 + $0xa0] sm:$0xff]
          %v1416 = vld [vmem:[#allocation8 + $0xa8] sm:$0xff]
          %v1417 = vld [vmem:[#allocation8 + $0xb0] sm:$0xff]
          %v1418 = vld [vmem:[#allocation8 + $0xb8] sm:$0xff]
          %v1419 = vld [vmem:[#allocation8 + $0xc0] sm:$0xff]
          %v1420 = vld [vmem:[#allocation8 + $0xc8] sm:$0xff]
          %v1421 = vld [vmem:[#allocation8 + $0xd0] sm:$0xff]
          %v1422 = vld [vmem:[#allocation8 + $0xd8] sm:$0xff]
          %v1423 = vld [vmem:[#allocation8 + $0xe0] sm:$0xff]
          %v1424 = vld [vmem:[#allocation8 + $0xe8] sm:$0xff]
          %v1425 = vld [vmem:[#allocation8 + $0xf0] sm:$0xff]
          %v1426 = vld [vmem:[#allocation8 + $0xf8] sm:$0xff]
          %v1427 = vld [vmem:[%s5] sm:$0x3]
          %v1429 = vlaneseq
          %v1430 = vshrl.u32 %v1429, 7
          %v1431 = vsub.s32 0, %v1430
          %v1432 = vrot.slane %v1427, %v1431
          %v1433 = vlaneseq
          %v1434 = vshrl.u32 %v1433, 7
          %v1435 = vsub.s32 1, %v1434
          %v1436 = vrot.slane %v1427, %v1435
          %v1471 = vunpack.c.l.b16 %v1395
          %v1472 = vunpack.c.h.b16 %v1395
          %v1473 = vunpack.c.l.b16 %v1396
          %v1474 = vunpack.c.h.b16 %v1396
          %v1475 = vunpack.c.l.b16 %v1397
          %v1476 = vunpack.c.h.b16 %v1397
          %v1477 = vunpack.c.l.b16 %v1398
          %v1478 = vunpack.c.h.b16 %v1398
          %v1479 = vunpack.c.l.b16 %v1399
          %v1480 = vunpack.c.h.b16 %v1399
          %v1481 = vunpack.c.l.b16 %v1400
          %v1482 = vunpack.c.h.b16 %v1400
          %v1483 = vunpack.c.l.b16 %v1401
          %v1484 = vunpack.c.h.b16 %v1401
          %v1485 = vunpack.c.l.b16 %v1402
          %v1486 = vunpack.c.h.b16 %v1402
          %v1487 = vunpack.c.l.b16 %v1403
          %v1488 = vunpack.c.h.b16 %v1403
          %v1489 = vunpack.c.l.b16 %v1404
          %v1490 = vunpack.c.h.b16 %v1404
          %v1491 = vunpack.c.l.b16 %v1405
          %v1492 = vunpack.c.h.b16 %v1405
          %v1493 = vunpack.c.l.b16 %v1406
          %v1494 = vunpack.c.h.b16 %v1406
          %v1495 = vunpack.c.l.b16 %v1407
          %v1496 = vunpack.c.h.b16 %v1407
          %v1497 = vunpack.c.l.b16 %v1408
          %v1498 = vunpack.c.h.b16 %v1408
          %v1499 = vunpack.c.l.b16 %v1409
          %v1500 = vunpack.c.h.b16 %v1409
          %v1501 = vunpack.c.l.b16 %v1410
          %v1502 = vunpack.c.h.b16 %v1410
          %v1503 = vunpack.c.l.b16 %v1411
          %v1504 = vunpack.c.h.b16 %v1411
          %v1505 = vunpack.c.l.b16 %v1412
          %v1506 = vunpack.c.h.b16 %v1412
          %v1507 = vunpack.c.l.b16 %v1413
          %v1508 = vunpack.c.h.b16 %v1413
          %v1509 = vunpack.c.l.b16 %v1414
          %v1510 = vunpack.c.h.b16 %v1414
          %v1511 = vunpack.c.l.b16 %v1415
          %v1512 = vunpack.c.h.b16 %v1415
          %v1513 = vunpack.c.l.b16 %v1416
          %v1514 = vunpack.c.h.b16 %v1416
          %v1515 = vunpack.c.l.b16 %v1417
          %v1516 = vunpack.c.h.b16 %v1417
          %v1517 = vunpack.c.l.b16 %v1418
          %v1518 = vunpack.c.h.b16 %v1418
          %v1519 = vunpack.c.l.b16 %v1419
          %v1520 = vunpack.c.h.b16 %v1419
          %v1521 = vunpack.c.l.b16 %v1420
          %v1522 = vunpack.c.h.b16 %v1420
          %v1523 = vunpack.c.l.b16 %v1421
          %v1524 = vunpack.c.h.b16 %v1421
          %v1525 = vunpack.c.l.b16 %v1422
          %v1526 = vunpack.c.h.b16 %v1422
          %v1527 = vunpack.c.l.b16 %v1423
          %v1528 = vunpack.c.h.b16 %v1423
          %v1529 = vunpack.c.l.b16 %v1424
          %v1530 = vunpack.c.h.b16 %v1424
          %v1531 = vunpack.c.l.b16 %v1425
          %v1532 = vunpack.c.h.b16 %v1425
          %v1533 = vunpack.c.l.b16 %v1426
          %v1534 = vunpack.c.h.b16 %v1426
          %v1535 = vpack.c.b16 %v1473, %v1471
          %v1536 = vpack.c.b16 %v1474, %v1472
          %v1537 = vpack.c.b16 %v1477, %v1475
          %v1538 = vpack.c.b16 %v1478, %v1476
          %v1539 = vpack.c.b16 %v1481, %v1479
          %v1540 = vpack.c.b16 %v1482, %v1480
          %v1541 = vpack.c.b16 %v1485, %v1483
          %v1542 = vpack.c.b16 %v1486, %v1484
          %v1543 = vpack.c.b16 %v1489, %v1487
          %v1544 = vpack.c.b16 %v1490, %v1488
          %v1545 = vpack.c.b16 %v1493, %v1491
          %v1546 = vpack.c.b16 %v1494, %v1492
          %v1547 = vpack.c.b16 %v1497, %v1495
          %v1548 = vpack.c.b16 %v1498, %v1496
          %v1549 = vpack.c.b16 %v1501, %v1499
          %v1550 = vpack.c.b16 %v1502, %v1500
          %v1551 = vpack.c.b16 %v1505, %v1503
          %v1552 = vpack.c.b16 %v1506, %v1504
          %v1553 = vpack.c.b16 %v1509, %v1507
          %v1554 = vpack.c.b16 %v1510, %v1508
          %v1555 = vpack.c.b16 %v1513, %v1511
          %v1556 = vpack.c.b16 %v1514, %v1512
          %v1557 = vpack.c.b16 %v1517, %v1515
          %v1558 = vpack.c.b16 %v1518, %v1516
          %v1559 = vpack.c.b16 %v1521, %v1519
          %v1560 = vpack.c.b16 %v1522, %v1520
          %v1561 = vpack.c.b16 %v1525, %v1523
          %v1562 = vpack.c.b16 %v1526, %v1524
          %v1563 = vpack.c.b16 %v1529, %v1527
          %v1564 = vpack.c.b16 %v1530, %v1528
          %v1565 = vpack.c.b16 %v1533, %v1531
          %v1566 = vpack.c.b16 %v1534, %v1532
          %1599 = vmatprep.subr.bf16.mxu0 %v1536
          %1600 = vmatpush1.bf16.msra.mxu0 %v1535
          %1601 = vmatprep.subr.bf16.mxu0 %v1538
          %1602 = vmatpush1.bf16.msra.mxu0 %v1537
          %1603 = vmatprep.subr.bf16.mxu0 %v1540
          %1604 = vmatpush1.bf16.msra.mxu0 %v1539
          %1605 = vmatprep.subr.bf16.mxu0 %v1542
          %1606 = vmatpush1.bf16.msra.mxu0 %v1541
          %1607 = vmatprep.subr.bf16.mxu0 %v1544
          %1608 = vmatpush1.bf16.msra.mxu0 %v1543
          %1609 = vmatprep.subr.bf16.mxu0 %v1546
          %1610 = vmatpush1.bf16.msra.mxu0 %v1545
          %1611 = vmatprep.subr.bf16.mxu0 %v1548
          %1612 = vmatpush1.bf16.msra.mxu0 %v1547
          %1613 = vmatprep.subr.bf16.mxu0 %v1550
          %1614 = vmatpush1.bf16.msra.mxu0 %v1549
          %1615 = vmatprep.subr.bf16.mxu0 %v1552
          %1616 = vmatpush1.bf16.msra.mxu0 %v1551
          %1617 = vmatprep.subr.bf16.mxu0 %v1554
          %1618 = vmatpush1.bf16.msra.mxu0 %v1553
          %1619 = vmatprep.subr.bf16.mxu0 %v1556
          %1620 = vmatpush1.bf16.msra.mxu0 %v1555
          %1621 = vmatprep.subr.bf16.mxu0 %v1558
          %1622 = vmatpush1.bf16.msra.mxu0 %v1557
          %1623 = vmatprep.subr.bf16.mxu0 %v1560
          %1624 = vmatpush1.bf16.msra.mxu0 %v1559
          %1625 = vmatprep.subr.bf16.mxu0 %v1562
          %1626 = vmatpush1.bf16.msra.mxu0 %v1561
          %1627 = vmatprep.subr.bf16.mxu0 %v1564
          %1628 = vmatpush1.bf16.msra.mxu0 %v1563
          %1629 = vmatprep.subr.bf16.mxu0 %v1566
          %1630 = vmatpush1.bf16.msra.mxu0 %v1565
          %1631 = vmatprep.mubr.bf16.mxu0 %v1394
          %1632 = vmatmul.mubr.bf16.gmra.mrb[0].mxu0 %v1393
          %v1633 = vpop.f32.mrb[0].mxu0
          %v1634 = vadd.f32 %v1432, %v1633
          %v1635 = vpop.f32.mrb[0].mxu0
          %v1636 = vadd.f32 %v1436, %v1635
          %v1637 = vpop.f32.mrb[0].mxu0
          %v1638 = vadd.f32 %v1432, %v1637
          %v1639 = vpop.f32.mrb[0].mxu0
          %v1640 = vadd.f32 %v1436, %v1639
          %1641 = vdwg.mxu0
          %1642 = vst [vmem:[%s317] sm:$0xff] %v1634
          %1643 = vst [vmem:[%s317 + $0x8] sm:$0xff] %v1636
          %1644 = vst [vmem:[%s317 + $0x10] sm:$0xff] %v1638
          %1645 = vst [vmem:[%s317 + $0x18] sm:$0xff] %v1640
        $region80: #{generator_forward.1} parent=43 // pred_fallthru
          _
        %p1646 = scmp.eq.s32.totalorder %s23, 2
        %s1647 = scalar_select %p1646, %s24, 0
        %s1648 = smul.u32 2, %s1647
        %p1649 = scmp.lt.s32.totalorder %s1648, 1
        %s1650 = scalar_select %p1649, %s1648, 1
        %s1651 = smul.addr %s1650, 2
        %s1652 = smul.addr %s1651, 8
        %s1653 = scalar_lea.vmem %s6, %s1652
        // Predicated region
        $region81: #{generator_forward.1} parent=43 // pred_check
          %p1654 = pneg %p184
        $region82: #{generator_forward.1} parent=43 // pred_check_branch
          %1656 = sbr.rel (%p1654) target = $region84
        $region83: #{generator_forward.1} parent=43 // pred_region
          %p1657 = scmp.eq.s32.totalorder %s23, 2
          %s1658 = scalar_select %p1657, %s24, 0
          %s1659 = smul.u32 2, %s1658
        $region84: #{generator_forward.1} parent=43 // pred_fallthru
          _
      $region44: #{generator_forward.1} parent=5 // pred_fallthru
        _
      %p1660 = scmp.le.s32.totalorder 2, %s14
      // Predicated region
      $region85: #{generator_forward.1} parent=5 // pred_check
        %p1661 = pneg %p1660
      $region86: #{generator_forward.1} parent=5 // pred_check_branch
        %1663 = sbr.rel (%p1661) target = $region88
      $region87: #{generator_forward.1} parent=5 // pred_region
        %s1664 = ssub.s32 %s14, 2
        // Predicated region
        $region89: #{generator_forward.1} parent=87 // pred_check
          %p1665 = pneg %p190
        $region90: #{generator_forward.1} parent=87 // pred_check_branch
          %1667 = sbr.rel (%p1665) target = $region92
        $region91: #{generator_forward.1} parent=87 // pred_region
          %p1668 = scmp.eq.s32.totalorder %s25, 2
          %s1669 = scalar_select %p1668, %s26, 0
          %s1670 = smul.u32 2, %s1669
          %p1671 = scmp.lt.s32.totalorder %s1670, 1
          %s1672 = scalar_select %p1671, %s1670, 1
          %s1673 = smul.addr %s1672, 2
          %s1674 = smul.addr %s1673, 8
          %s1675 = scalar_lea.vmem %s6, %s1674
        $region92: #{generator_forward.1} parent=87 // pred_fallthru
          _
      $region88: #{generator_forward.1} parent=5 // pred_fallthru
        _
    $region6: #{generator_forward.1} parent=1 // loop_footer
      %s18 = sadd.s32 1, %s14
    $region7: #{generator_forward.1} parent=1 // loop_footer_branch
      %13 = sbr.rel target = $region3
    $region8: #{generator_forward.1} parent=1 // loop_exit
      _
    %1676 = vsyncpa [#allocation7], 1
    %s1677 = scalar_lea.sflag [#allocation7], 1
    %1678 = vsyncpa %s1677, 1
    %1679 = vsyncpa [#allocation9], 1

</llo_original>
